<compile_context>
chip_gen: v7x
topology: tpu7x:2x2x1
jax: 0.10.0
libtpu: 0.0.40
codegen_flags: <defaults>
</compile_context>

<pallas_src>
import jax
import jax.numpy as jnp
from jax.experimental import pallas as pl
from jax.experimental.pallas import tpu as pltpu

# ---------------- model hyper-params (small, consistent with the module) ----
B = 2            # batch
N = 8            # number of latents (sequence length)
D = 32           # latent_dim
HEADS = 4        # latent_heads
DIM_HEAD = 16    # latent_dim_head
INNER = HEADS * DIM_HEAD           # 64
FF_HIDDEN = D * 4                  # 128  (mult = 4)
LAYERS = 2                         # folded LatentAttention depth (self_per_cross_attn)
LN_EPS = 1e-5
SCALE = DIM_HEAD ** -0.5
NEG_BIAS = -1e30                   # additive mask fill (softmax weight -> 0)
M = B * N


def _layer_norm(v, g, b):
    # v: (M, D); g, b: (1, D) -- PyTorch LayerNorm (biased variance, eps=1e-5)
    mu = jnp.mean(v, axis=-1, keepdims=True)
    var = jnp.mean((v - mu) ** 2, axis=-1, keepdims=True)
    return (v - mu) * jax.lax.rsqrt(var + LN_EPS) * g + b


def _gelu_exact(x):
    # matches torch.nn.functional.gelu default (erf variant)
    return 0.5 * x * (1.0 + jax.lax.erf(x * (2.0 ** -0.5)))


def latent_stack_kernel(
    x_ref,       # (M, D)              f32  input latents (read at layer 0 only)
    bias_ref,    # (M, M)              f32  block-diagonal additive key-mask bias
    qkv_w_ref,   # (1, D, 3*INNER)     f32  [Wq | Wk | Wv] of the current layer
    wo_ref,      # (1, INNER, D)       f32
    vec_ref,     # (1, 6, D)           f32  [ln1_g, ln1_b, bo, ln2_g, ln2_b, b2]
    w1_ref,      # (1, D, 2*FF_HIDDEN) f32  [W1_value | W1_gate]
    b1_ref,      # (1, 1, 2*FF_HIDDEN) f32
    w2_ref,      # (1, FF_HIDDEN, D)   f32
    o_ref,       # (M, D)              f32  resident residual stream / final output
):
    l = pl.program_id(0)

    # Layer 0: seed the resident residual stream from the input latents.
    @pl.when(l == 0)
    def _():
        o_ref[...] = x_ref[...]

    x = o_ref[...]                      # (M, D) f32 residual stream
    bias = bias_ref[...]                # (M, M) f32
    vecs = vec_ref[0]                   # (6, D) f32
    ln1_g, ln1_b = vecs[0:1], vecs[1:2]
    bo = vecs[2:3]
    ln2_g, ln2_b = vecs[3:4], vecs[4:5]
    b2 = vecs[5:6]

    # ---- PreNorm + multi-head self-attention --------------------------------
    x2 = _layer_norm(x, ln1_g, ln1_b)
    # One fused projection matmul: (M, D) @ (D, 3*INNER).
    qkv = jnp.dot(x2, qkv_w_ref[0], preferred_element_type=jnp.float32)

    outs = []
    for h in range(HEADS):              # static unroll; static lane slices only
        lo = h * DIM_HEAD
        qh = qkv[:, lo:lo + DIM_HEAD]                               # (M, dh)
        kh = qkv[:, INNER + lo:INNER + lo + DIM_HEAD]               # (M, dh)
        vh = qkv[:, 2 * INNER + lo:2 * INNER + lo + DIM_HEAD]       # (M, dh)

        sim = jnp.dot(qh, kh.T, preferred_element_type=jnp.float32) * SCALE + bias
        sim = sim - jnp.max(sim, axis=-1, keepdims=True)            # stable
        e = jnp.exp(sim)
        attn = e / jnp.sum(e, axis=-1, keepdims=True)               # exact softmax
        outs.append(jnp.dot(attn, vh, preferred_element_type=jnp.float32))

    out_all = jnp.concatenate(outs, axis=-1)                        # (M, INNER)
    # Single fused output projection against the un-split Wo.
    x = x + jnp.dot(out_all, wo_ref[0], preferred_element_type=jnp.float32) + bo

    # ---- PreNorm + GEGLU FeedForward ----------------------------------------
    x2 = _layer_norm(x, ln2_g, ln2_b)
    h1 = jnp.dot(x2, w1_ref[0], preferred_element_type=jnp.float32) + b1_ref[0]
    a = h1[:, :FF_HIDDEN]               # value half (128-lane-aligned slice)
    g = h1[:, FF_HIDDEN:]               # gate half
    geglu = a * _gelu_exact(g)
    ff = jnp.dot(geglu, w2_ref[0], preferred_element_type=jnp.float32) + b2

    o_ref[...] = x + ff                 # residual; stays resident for next layer


def latent_attention_stack(x, mask_bool, layer_params):
    """Apply LAYERS LatentAttention blocks to x in a single pallas_call.

    x: (B, N, D) f32 ; mask_bool: (B, N) bool over key positions.
    layer_params: list of per-layer parameter dicts (length = LAYERS).
    """
    b_, n_, d_ = x.shape
    m = b_ * n_
    n_layers = len(layer_params)
    x_flat = x.reshape(m, d_)

    # Block-diagonal additive mask bias: 0 where (same batch AND key valid),
    # else -1e30 (equivalent to the per-batch masked softmax in the module).
    batch_ids = jnp.repeat(jnp.arange(b_, dtype=jnp.int32), n_)
    same_batch = batch_ids[:, None] == batch_ids[None, :]
    key_ok = mask_bool.reshape(1, m)
    mask_bias = jnp.where(same_batch & key_ok, 0.0, NEG_BIAS).astype(jnp.float32)

    # Per-layer weight slabs stacked along a leading layer axis.
    qkv_w = jnp.stack([jnp.concatenate([p["wq"], p["wkv"]], axis=1)
                       for p in layer_params])                      # (L, D, 3*INNER)
    wo = jnp.stack([p["wo"] for p in layer_params])                 # (L, INNER, D)
    vecs = jnp.stack([jnp.concatenate([p["ln1_g"], p["ln1_b"], p["bo"],
                                       p["ln2_g"], p["ln2_b"], p["b2"]], axis=0)
                      for p in layer_params])                       # (L, 6, D)
    w1 = jnp.stack([p["w1"] for p in layer_params])                 # (L, D, 2F)
    b1 = jnp.stack([p["b1"] for p in layer_params])                 # (L, 1, 2F)
    w2 = jnp.stack([p["w2"] for p in layer_params])                 # (L, F, D)

    def full_spec(shape):
        nd = len(shape)
        return pl.BlockSpec(tuple(shape), lambda l, nd=nd: (0,) * nd)

    def per_layer_spec(shape):
        nd = len(shape)
        return pl.BlockSpec((1,) + tuple(shape[1:]),
                            lambda l, nd=nd: (l,) + (0,) * (nd - 1))

    out_flat = pl.pallas_call(
        latent_stack_kernel,
        out_shape=jax.ShapeDtypeStruct((m, d_), jnp.float32),
        grid=(n_layers,),   # layer axis: carried residual -> "arbitrary"
        in_specs=[
            full_spec(x_flat.shape),
            full_spec(mask_bias.shape),
            per_layer_spec(qkv_w.shape),
            per_layer_spec(wo.shape),
            per_layer_spec(vecs.shape),
            per_layer_spec(w1.shape),
            per_layer_spec(b1.shape),
            per_layer_spec(w2.shape),
        ],
        out_specs=full_spec((m, d_)),   # constant index -> resident accumulator
        compiler_params=pltpu.CompilerParams(dimension_semantics=("arbitrary",)),
    )(x_flat, mask_bias, qkv_w, wo, vecs, w1, b1, w2)

    return out_flat.reshape(b_, n_, d_)


# ---------------- pure-JAX reference (same f32 math, per layer) --------------
def latent_layer_ref(x, mask_bool, p):
    def ln(v, g, b):
        mu = jnp.mean(v, axis=-1, keepdims=True)
        var = jnp.mean((v - mu) ** 2, axis=-1, keepdims=True)
        return (v - mu) * jax.lax.rsqrt(var + LN_EPS) * g + b

    b_, n_, _ = x.shape
    x2 = ln(x, p["ln1_g"], p["ln1_b"])
    q = x2 @ p["wq"]
    kv = x2 @ p["wkv"]
    k, v = kv[..., :INNER], kv[..., INNER:]
    qh = q.reshape(b_, n_, HEADS, DIM_HEAD)
    kh = k.reshape(b_, n_, HEADS, DIM_HEAD)
    vh = v.reshape(b_, n_, HEADS, DIM_HEAD)
    sim = jnp.einsum("bihd,bjhd->bhij", qh, kh) * SCALE
    sim = jnp.where(mask_bool[:, None, None, :], sim, NEG_BIAS)
    attn = jax.nn.softmax(sim, axis=-1)
    out = jnp.einsum("bhij,bjhd->bihd", attn, vh).reshape(b_, n_, INNER)
    x = x + (out @ p["wo"] + p["bo"])

    x2 = ln(x, p["ln2_g"], p["ln2_b"])
    h1 = x2 @ p["w1"] + p["b1"]
    a, g = h1[..., :FF_HIDDEN], h1[..., FF_HIDDEN:]
    return x + ((a * _gelu_exact(g)) @ p["w2"] + p["b2"])


def make_params(key):
    ks = jax.random.split(key, 12)
    n = lambda k, shape, s=0.05: (s * jax.random.normal(k, shape)).astype(jnp.float32)
    return {
        "ln1_g": 1.0 + n(ks[0], (1, D), 0.01),
        "ln1_b": n(ks[1], (1, D), 0.01),
        "wq": n(ks[2], (D, INNER)),
        "wkv": n(ks[3], (D, 2 * INNER)),
        "wo": n(ks[4], (INNER, D)),
        "bo": n(ks[5], (1, D), 0.01),
        "ln2_g": 1.0 + n(ks[6], (1, D), 0.01),
        "ln2_b": n(ks[7], (1, D), 0.01),
        "w1": n(ks[8], (D, 2 * FF_HIDDEN)),
        "b1": n(ks[9], (1, 2 * FF_HIDDEN), 0.01),
        "w2": n(ks[10], (FF_HIDDEN, D)),
        "b2": n(ks[11], (1, D), 0.01),
    }


if __name__ == "__main__":
    key = jax.random.PRNGKey(0)
    kx, kp = jax.random.split(key)
    x = jax.random.normal(kx, (B, N, D), dtype=jnp.float32)
    # key mask: batch 0 keeps all positions, batch 1 masks the last two keys
    lens = jnp.array([N, N - 2], dtype=jnp.int32)
    mask = jnp.arange(N)[None, :] < lens[:, None]          # (B, N) bool

    layer_keys = jax.random.split(kp, LAYERS)
    layer_params = [make_params(k) for k in layer_keys]

    out = latent_attention_stack(x, mask, layer_params)
    out = jax.block_until_ready(out)

    ref = x
    for p in layer_params:
        ref = latent_layer_ref(ref, mask, p)

    assert out.shape == (B, N, D) and out.dtype == jnp.float32
    assert jnp.allclose(out, ref, rtol=1e-4, atol=1e-4), "mismatch vs JAX reference"

    print("KERNEL_OK")
</pallas_src>

<mosaic_0001>
module attributes {stable_mosaic.version = 11 : i64} {
  func.func @latent_stack_kernel(%arg0: i32, %arg1: memref<16x32xf32, #tpu.memory_space<vmem>>, %arg2: memref<16x16xf32, #tpu.memory_space<vmem>>, %arg3: memref<1x32x192xf32, #tpu.memory_space<vmem>>, %arg4: memref<1x64x32xf32, #tpu.memory_space<vmem>>, %arg5: memref<1x6x32xf32, #tpu.memory_space<vmem>>, %arg6: memref<1x32x256xf32, #tpu.memory_space<vmem>>, %arg7: memref<1x1x256xf32, #tpu.memory_space<vmem>>, %arg8: memref<1x128x32xf32, #tpu.memory_space<vmem>>, %arg9: memref<16x32xf32, #tpu.memory_space<vmem>>) attributes {dimension_semantics = [#tpu.dimension_semantics<arbitrary>], iteration_bounds = array<i64: 2>, scalar_prefetch = 0 : i64, scratch_operands = 0 : i64, tpu.core_type = #tpu.core_type<tc>, window_params = [{pipeline_mode = #tpu.pipeline_mode<synchronous>, transform_indices = @transform_0, window_bounds = array<i64: 16, 32>}, {pipeline_mode = #tpu.pipeline_mode<synchronous>, transform_indices = @transform_1, window_bounds = array<i64: 16, 16>}, {transform_indices = @transform_2, window_bounds = array<i64: 1, 32, 192>}, {transform_indices = @transform_3, window_bounds = array<i64: 1, 64, 32>}, {transform_indices = @transform_4, window_bounds = array<i64: 1, 6, 32>}, {transform_indices = @transform_5, window_bounds = array<i64: 1, 32, 256>}, {transform_indices = @transform_6, window_bounds = array<i64: 1, 1, 256>}, {transform_indices = @transform_7, window_bounds = array<i64: 1, 128, 32>}, {pipeline_mode = #tpu.pipeline_mode<synchronous>, transform_indices = @transform_8, window_bounds = array<i64: 16, 32>}]} {
    %c0_i32 = arith.constant 0 : i32
    %0 = arith.cmpi eq, %arg0, %c0_i32 : i32
    %1 = arith.extui %0 : i1 to i32
    %c0_i32_0 = arith.constant 0 : i32
    %2 = arith.cmpi ne, %1, %c0_i32_0 : i32
    scf.if %2 {
      %c0_60 = arith.constant 0 : index
      %c0_61 = arith.constant 0 : index
      %164 = vector.load %arg1[%c0_60, %c0_61] : memref<16x32xf32, #tpu.memory_space<vmem>>, vector<16x32xf32>
      %c0_62 = arith.constant 0 : index
      %c0_63 = arith.constant 0 : index
      %165 = vector.load %arg9[%c0_62, %c0_63] : memref<16x32xf32, #tpu.memory_space<vmem>>, vector<16x32xf32>
      tpu.vector_store %arg9[%c0_62, %c0_63], %164 {strides = array<i32>} : memref<16x32xf32, #tpu.memory_space<vmem>>, vector<16x32xf32>,
    } else {
    }
    %c0 = arith.constant 0 : index
    %c0_1 = arith.constant 0 : index
    %3 = vector.load %arg9[%c0, %c0_1] : memref<16x32xf32, #tpu.memory_space<vmem>>, vector<16x32xf32>
    %c0_2 = arith.constant 0 : index
    %c0_3 = arith.constant 0 : index
    %4 = vector.load %arg2[%c0_2, %c0_3] : memref<16x16xf32, #tpu.memory_space<vmem>>, vector<16x16xf32>
    %c0_4 = arith.constant 0 : index
    %c0_5 = arith.constant 0 : index
    %c0_6 = arith.constant 0 : index
    %5 = vector.load %arg5[%c0_4, %c0_5, %c0_6] : memref<1x6x32xf32, #tpu.memory_space<vmem>>, vector<1x6x32xf32>
    %6 = vector.shape_cast %5 : vector<1x6x32xf32> to vector<6x32xf32>
    %7 = vector.extract_strided_slice %6 {offsets = [0, 0], sizes = [1, 32], strides = [1, 1]} : vector<6x32xf32> to vector<1x32xf32>
    %8 = vector.extract_strided_slice %6 {offsets = [1, 0], sizes = [1, 32], strides = [1, 1]} : vector<6x32xf32> to vector<1x32xf32>
    %9 = vector.extract_strided_slice %6 {offsets = [2, 0], sizes = [1, 32], strides = [1, 1]} : vector<6x32xf32> to vector<1x32xf32>
    %10 = vector.extract_strided_slice %6 {offsets = [3, 0], sizes = [1, 32], strides = [1, 1]} : vector<6x32xf32> to vector<1x32xf32>
    %11 = vector.extract_strided_slice %6 {offsets = [4, 0], sizes = [1, 32], strides = [1, 1]} : vector<6x32xf32> to vector<1x32xf32>
    %12 = vector.extract_strided_slice %6 {offsets = [5, 0], sizes = [1, 32], strides = [1, 1]} : vector<6x32xf32> to vector<1x32xf32>
    %cst = arith.constant dense<0.000000e+00> : vector<16xf32>
    %13 = vector.multi_reduction <add>, %3, %cst [1] : vector<16x32xf32> to vector<16xf32>
    %14 = vector.shape_cast %13 : vector<16xf32> to vector<16x1xf32>
    %cst_7 = arith.constant 3.200000e+01 : f32
    %15 = vector.broadcast %cst_7 : f32 to vector<16x1xf32>
    %16 = arith.divf %14, %15 : vector<16x1xf32>
    %17 = vector.broadcast %16 : vector<16x1xf32> to vector<16x32xf32>
    %18 = arith.subf %3, %17 : vector<16x32xf32>
    %19 = arith.mulf %18, %18 : vector<16x32xf32>
    %cst_8 = arith.constant dense<0.000000e+00> : vector<16xf32>
    %20 = vector.multi_reduction <add>, %19, %cst_8 [1] : vector<16x32xf32> to vector<16xf32>
    %21 = vector.shape_cast %20 : vector<16xf32> to vector<16x1xf32>
    %cst_9 = arith.constant 3.200000e+01 : f32
    %22 = vector.broadcast %cst_9 : f32 to vector<16x1xf32>
    %23 = arith.divf %21, %22 : vector<16x1xf32>
    %24 = vector.broadcast %16 : vector<16x1xf32> to vector<16x32xf32>
    %25 = arith.subf %3, %24 : vector<16x32xf32>
    %cst_10 = arith.constant 9.99999974E-6 : f32
    %26 = vector.broadcast %cst_10 : f32 to vector<16x1xf32>
    %27 = arith.addf %23, %26 : vector<16x1xf32>
    %28 = math.rsqrt %27 : vector<16x1xf32>
    %29 = vector.broadcast %28 : vector<16x1xf32> to vector<16x32xf32>
    %30 = arith.mulf %25, %29 : vector<16x32xf32>
    %31 = vector.broadcast %7 : vector<1x32xf32> to vector<16x32xf32>
    %32 = arith.mulf %30, %31 : vector<16x32xf32>
    %33 = vector.broadcast %8 : vector<1x32xf32> to vector<16x32xf32>
    %34 = arith.addf %32, %33 : vector<16x32xf32>
    %c0_11 = arith.constant 0 : index
    %c0_12 = arith.constant 0 : index
    %c0_13 = arith.constant 0 : index
    %35 = vector.load %arg3[%c0_11, %c0_12, %c0_13] : memref<1x32x192xf32, #tpu.memory_space<vmem>>, vector<1x32x192xf32>
    %36 = vector.shape_cast %35 : vector<1x32x192xf32> to vector<32x192xf32>
    %cst_14 = arith.constant dense<0.000000e+00> : vector<16x192xf32>
    %37 = tpu.matmul %34, %36, %cst_14 {dimension_numbers = #tpu.dot_dimension_numbers<[1], [0], [0], [1], [0, 0, 1, 1], [], []>} : vector<16x32xf32>, vector<32x192xf32>, vector<16x192xf32> -> vector<16x192xf32>
    %38 = vector.extract_strided_slice %37 {offsets = [0, 0], sizes = [16, 16], strides = [1, 1]} : vector<16x192xf32> to vector<16x16xf32>
    %39 = vector.extract_strided_slice %37 {offsets = [0, 64], sizes = [16, 16], strides = [1, 1]} : vector<16x192xf32> to vector<16x16xf32>
    %40 = vector.extract_strided_slice %37 {offsets = [0, 128], sizes = [16, 16], strides = [1, 1]} : vector<16x192xf32> to vector<16x16xf32>
    %41 = tpu.transpose %39, [1, 0] : vector<16x16xf32> -> vector<16x16xf32>
    %cst_15 = arith.constant dense<0.000000e+00> : vector<16x16xf32>
    %42 = tpu.matmul %38, %41, %cst_15 {dimension_numbers = #tpu.dot_dimension_numbers<[1], [0], [0], [1], [0, 0, 1, 1], [], []>} : vector<16x16xf32>, vector<16x16xf32>, vector<16x16xf32> -> vector<16x16xf32>
    %cst_16 = arith.constant 2.500000e-01 : f32
    %43 = vector.broadcast %cst_16 : f32 to vector<16x16xf32>
    %44 = arith.mulf %42, %43 : vector<16x16xf32>
    %45 = arith.addf %44, %4 : vector<16x16xf32>
    %cst_17 = arith.constant dense<0xFF800000> : vector<16xf32>
    %46 = vector.multi_reduction <maximumf>, %45, %cst_17 [1] : vector<16x16xf32> to vector<16xf32>
    %47 = vector.shape_cast %46 : vector<16xf32> to vector<16x1xf32>
    %48 = vector.broadcast %47 : vector<16x1xf32> to vector<16x16xf32>
    %49 = arith.subf %45, %48 : vector<16x16xf32>
    %50 = math.exp %49 : vector<16x16xf32>
    %cst_18 = arith.constant dense<0.000000e+00> : vector<16xf32>
    %51 = vector.multi_reduction <add>, %50, %cst_18 [1] : vector<16x16xf32> to vector<16xf32>
    %52 = vector.shape_cast %51 : vector<16xf32> to vector<16x1xf32>
    %53 = vector.broadcast %52 : vector<16x1xf32> to vector<16x16xf32>
    %54 = arith.divf %50, %53 : vector<16x16xf32>
    %cst_19 = arith.constant dense<0.000000e+00> : vector<16x16xf32>
    %55 = tpu.matmul %54, %40, %cst_19 {dimension_numbers = #tpu.dot_dimension_numbers<[1], [0], [0], [1], [0, 0, 1, 1], [], []>} : vector<16x16xf32>, vector<16x16xf32>, vector<16x16xf32> -> vector<16x16xf32>
    %56 = vector.extract_strided_slice %37 {offsets = [0, 16], sizes = [16, 16], strides = [1, 1]} : vector<16x192xf32> to vector<16x16xf32>
    %57 = vector.extract_strided_slice %37 {offsets = [0, 80], sizes = [16, 16], strides = [1, 1]} : vector<16x192xf32> to vector<16x16xf32>
    %58 = vector.extract_strided_slice %37 {offsets = [0, 144], sizes = [16, 16], strides = [1, 1]} : vector<16x192xf32> to vector<16x16xf32>
    %59 = tpu.transpose %57, [1, 0] : vector<16x16xf32> -> vector<16x16xf32>
    %cst_20 = arith.constant dense<0.000000e+00> : vector<16x16xf32>
    %60 = tpu.matmul %56, %59, %cst_20 {dimension_numbers = #tpu.dot_dimension_numbers<[1], [0], [0], [1], [0, 0, 1, 1], [], []>} : vector<16x16xf32>, vector<16x16xf32>, vector<16x16xf32> -> vector<16x16xf32>
    %cst_21 = arith.constant 2.500000e-01 : f32
    %61 = vector.broadcast %cst_21 : f32 to vector<16x16xf32>
    %62 = arith.mulf %60, %61 : vector<16x16xf32>
    %63 = arith.addf %62, %4 : vector<16x16xf32>
    %cst_22 = arith.constant dense<0xFF800000> : vector<16xf32>
    %64 = vector.multi_reduction <maximumf>, %63, %cst_22 [1] : vector<16x16xf32> to vector<16xf32>
    %65 = vector.shape_cast %64 : vector<16xf32> to vector<16x1xf32>
    %66 = vector.broadcast %65 : vector<16x1xf32> to vector<16x16xf32>
    %67 = arith.subf %63, %66 : vector<16x16xf32>
    %68 = math.exp %67 : vector<16x16xf32>
    %cst_23 = arith.constant dense<0.000000e+00> : vector<16xf32>
    %69 = vector.multi_reduction <add>, %68, %cst_23 [1] : vector<16x16xf32> to vector<16xf32>
    %70 = vector.shape_cast %69 : vector<16xf32> to vector<16x1xf32>
    %71 = vector.broadcast %70 : vector<16x1xf32> to vector<16x16xf32>
    %72 = arith.divf %68, %71 : vector<16x16xf32>
    %cst_24 = arith.constant dense<0.000000e+00> : vector<16x16xf32>
    %73 = tpu.matmul %72, %58, %cst_24 {dimension_numbers = #tpu.dot_dimension_numbers<[1], [0], [0], [1], [0, 0, 1, 1], [], []>} : vector<16x16xf32>, vector<16x16xf32>, vector<16x16xf32> -> vector<16x16xf32>
    %74 = vector.extract_strided_slice %37 {offsets = [0, 32], sizes = [16, 16], strides = [1, 1]} : vector<16x192xf32> to vector<16x16xf32>
    %75 = vector.extract_strided_slice %37 {offsets = [0, 96], sizes = [16, 16], strides = [1, 1]} : vector<16x192xf32> to vector<16x16xf32>
    %76 = vector.extract_strided_slice %37 {offsets = [0, 160], sizes = [16, 16], strides = [1, 1]} : vector<16x192xf32> to vector<16x16xf32>
    %77 = tpu.transpose %75, [1, 0] : vector<16x16xf32> -> vector<16x16xf32>
    %cst_25 = arith.constant dense<0.000000e+00> : vector<16x16xf32>
    %78 = tpu.matmul %74, %77, %cst_25 {dimension_numbers = #tpu.dot_dimension_numbers<[1], [0], [0], [1], [0, 0, 1, 1], [], []>} : vector<16x16xf32>, vector<16x16xf32>, vector<16x16xf32> -> vector<16x16xf32>
    %cst_26 = arith.constant 2.500000e-01 : f32
    %79 = vector.broadcast %cst_26 : f32 to vector<16x16xf32>
    %80 = arith.mulf %78, %79 : vector<16x16xf32>
    %81 = arith.addf %80, %4 : vector<16x16xf32>
    %cst_27 = arith.constant dense<0xFF800000> : vector<16xf32>
    %82 = vector.multi_reduction <maximumf>, %81, %cst_27 [1] : vector<16x16xf32> to vector<16xf32>
    %83 = vector.shape_cast %82 : vector<16xf32> to vector<16x1xf32>
    %84 = vector.broadcast %83 : vector<16x1xf32> to vector<16x16xf32>
    %85 = arith.subf %81, %84 : vector<16x16xf32>
    %86 = math.exp %85 : vector<16x16xf32>
    %cst_28 = arith.constant dense<0.000000e+00> : vector<16xf32>
    %87 = vector.multi_reduction <add>, %86, %cst_28 [1] : vector<16x16xf32> to vector<16xf32>
    %88 = vector.shape_cast %87 : vector<16xf32> to vector<16x1xf32>
    %89 = vector.broadcast %88 : vector<16x1xf32> to vector<16x16xf32>
    %90 = arith.divf %86, %89 : vector<16x16xf32>
    %cst_29 = arith.constant dense<0.000000e+00> : vector<16x16xf32>
    %91 = tpu.matmul %90, %76, %cst_29 {dimension_numbers = #tpu.dot_dimension_numbers<[1], [0], [0], [1], [0, 0, 1, 1], [], []>} : vector<16x16xf32>, vector<16x16xf32>, vector<16x16xf32> -> vector<16x16xf32>
    %92 = vector.extract_strided_slice %37 {offsets = [0, 48], sizes = [16, 16], strides = [1, 1]} : vector<16x192xf32> to vector<16x16xf32>
    %93 = vector.extract_strided_slice %37 {offsets = [0, 112], sizes = [16, 16], strides = [1, 1]} : vector<16x192xf32> to vector<16x16xf32>
    %94 = vector.extract_strided_slice %37 {offsets = [0, 176], sizes = [16, 16], strides = [1, 1]} : vector<16x192xf32> to vector<16x16xf32>
    %95 = tpu.transpose %93, [1, 0] : vector<16x16xf32> -> vector<16x16xf32>
    %cst_30 = arith.constant dense<0.000000e+00> : vector<16x16xf32>
    %96 = tpu.matmul %92, %95, %cst_30 {dimension_numbers = #tpu.dot_dimension_numbers<[1], [0], [0], [1], [0, 0, 1, 1], [], []>} : vector<16x16xf32>, vector<16x16xf32>, vector<16x16xf32> -> vector<16x16xf32>
    %cst_31 = arith.constant 2.500000e-01 : f32
    %97 = vector.broadcast %cst_31 : f32 to vector<16x16xf32>
    %98 = arith.mulf %96, %97 : vector<16x16xf32>
    %99 = arith.addf %98, %4 : vector<16x16xf32>
    %cst_32 = arith.constant dense<0xFF800000> : vector<16xf32>
    %100 = vector.multi_reduction <maximumf>, %99, %cst_32 [1] : vector<16x16xf32> to vector<16xf32>
    %101 = vector.shape_cast %100 : vector<16xf32> to vector<16x1xf32>
    %102 = vector.broadcast %101 : vector<16x1xf32> to vector<16x16xf32>
    %103 = arith.subf %99, %102 : vector<16x16xf32>
    %104 = math.exp %103 : vector<16x16xf32>
    %cst_33 = arith.constant dense<0.000000e+00> : vector<16xf32>
    %105 = vector.multi_reduction <add>, %104, %cst_33 [1] : vector<16x16xf32> to vector<16xf32>
    %106 = vector.shape_cast %105 : vector<16xf32> to vector<16x1xf32>
    %107 = vector.broadcast %106 : vector<16x1xf32> to vector<16x16xf32>
    %108 = arith.divf %104, %107 : vector<16x16xf32>
    %cst_34 = arith.constant dense<0.000000e+00> : vector<16x16xf32>
    %109 = tpu.matmul %108, %94, %cst_34 {dimension_numbers = #tpu.dot_dimension_numbers<[1], [0], [0], [1], [0, 0, 1, 1], [], []>} : vector<16x16xf32>, vector<16x16xf32>, vector<16x16xf32> -> vector<16x16xf32>
    %110 = tpu.concatenate %55, %73, %91, %109 in 1 : vector<16x16xf32>, vector<16x16xf32>, vector<16x16xf32>, vector<16x16xf32> -> vector<16x64xf32>
    %c0_35 = arith.constant 0 : index
    %c0_36 = arith.constant 0 : index
    %c0_37 = arith.constant 0 : index
    %111 = vector.load %arg4[%c0_35, %c0_36, %c0_37] : memref<1x64x32xf32, #tpu.memory_space<vmem>>, vector<1x64x32xf32>
    %112 = vector.shape_cast %111 : vector<1x64x32xf32> to vector<64x32xf32>
    %cst_38 = arith.constant dense<0.000000e+00> : vector<16x32xf32>
    %113 = tpu.matmul %110, %112, %cst_38 {dimension_numbers = #tpu.dot_dimension_numbers<[1], [0], [0], [1], [0, 0, 1, 1], [], []>} : vector<16x64xf32>, vector<64x32xf32>, vector<16x32xf32> -> vector<16x32xf32>
    %114 = arith.addf %3, %113 : vector<16x32xf32>
    %115 = vector.broadcast %9 : vector<1x32xf32> to vector<16x32xf32>
    %116 = arith.addf %114, %115 : vector<16x32xf32>
    %cst_39 = arith.constant dense<0.000000e+00> : vector<16xf32>
    %117 = vector.multi_reduction <add>, %116, %cst_39 [1] : vector<16x32xf32> to vector<16xf32>
    %118 = vector.shape_cast %117 : vector<16xf32> to vector<16x1xf32>
    %cst_40 = arith.constant 3.200000e+01 : f32
    %119 = vector.broadcast %cst_40 : f32 to vector<16x1xf32>
    %120 = arith.divf %118, %119 : vector<16x1xf32>
    %121 = vector.broadcast %120 : vector<16x1xf32> to vector<16x32xf32>
    %122 = arith.subf %116, %121 : vector<16x32xf32>
    %123 = arith.mulf %122, %122 : vector<16x32xf32>
    %cst_41 = arith.constant dense<0.000000e+00> : vector<16xf32>
    %124 = vector.multi_reduction <add>, %123, %cst_41 [1] : vector<16x32xf32> to vector<16xf32>
    %125 = vector.shape_cast %124 : vector<16xf32> to vector<16x1xf32>
    %cst_42 = arith.constant 3.200000e+01 : f32
    %126 = vector.broadcast %cst_42 : f32 to vector<16x1xf32>
    %127 = arith.divf %125, %126 : vector<16x1xf32>
    %128 = vector.broadcast %120 : vector<16x1xf32> to vector<16x32xf32>
    %129 = arith.subf %116, %128 : vector<16x32xf32>
    %cst_43 = arith.constant 9.99999974E-6 : f32
    %130 = vector.broadcast %cst_43 : f32 to vector<16x1xf32>
    %131 = arith.addf %127, %130 : vector<16x1xf32>
    %132 = math.rsqrt %131 : vector<16x1xf32>
    %133 = vector.broadcast %132 : vector<16x1xf32> to vector<16x32xf32>
    %134 = arith.mulf %129, %133 : vector<16x32xf32>
    %135 = vector.broadcast %10 : vector<1x32xf32> to vector<16x32xf32>
    %136 = arith.mulf %134, %135 : vector<16x32xf32>
    %137 = vector.broadcast %11 : vector<1x32xf32> to vector<16x32xf32>
    %138 = arith.addf %136, %137 : vector<16x32xf32>
    %c0_44 = arith.constant 0 : index
    %c0_45 = arith.constant 0 : index
    %c0_46 = arith.constant 0 : index
    %139 = vector.load %arg6[%c0_44, %c0_45, %c0_46] : memref<1x32x256xf32, #tpu.memory_space<vmem>>, vector<1x32x256xf32>
    %140 = vector.shape_cast %139 : vector<1x32x256xf32> to vector<32x256xf32>
    %cst_47 = arith.constant dense<0.000000e+00> : vector<16x256xf32>
    %141 = tpu.matmul %138, %140, %cst_47 {dimension_numbers = #tpu.dot_dimension_numbers<[1], [0], [0], [1], [0, 0, 1, 1], [], []>} : vector<16x32xf32>, vector<32x256xf32>, vector<16x256xf32> -> vector<16x256xf32>
    %c0_48 = arith.constant 0 : index
    %c0_49 = arith.constant 0 : index
    %c0_50 = arith.constant 0 : index
    %142 = vector.load %arg7[%c0_48, %c0_49, %c0_50] : memref<1x1x256xf32, #tpu.memory_space<vmem>>, vector<1x1x256xf32>
    %143 = vector.shape_cast %142 : vector<1x1x256xf32> to vector<1x256xf32>
    %144 = vector.broadcast %143 : vector<1x256xf32> to vector<16x256xf32>
    %145 = arith.addf %141, %144 : vector<16x256xf32>
    %146 = vector.extract_strided_slice %145 {offsets = [0, 0], sizes = [16, 128], strides = [1, 1]} : vector<16x256xf32> to vector<16x128xf32>
    %147 = vector.extract_strided_slice %145 {offsets = [0, 128], sizes = [16, 128], strides = [1, 1]} : vector<16x256xf32> to vector<16x128xf32>
    %cst_51 = arith.constant 5.000000e-01 : f32
    %148 = vector.broadcast %cst_51 : f32 to vector<16x128xf32>
    %149 = arith.mulf %148, %147 : vector<16x128xf32>
    %cst_52 = arith.constant 0.707106769 : f32
    %150 = vector.broadcast %cst_52 : f32 to vector<16x128xf32>
    %151 = arith.mulf %147, %150 : vector<16x128xf32>
    %152 = math.erf %151 : vector<16x128xf32>
    %cst_53 = arith.constant 1.000000e+00 : f32
    %153 = vector.broadcast %cst_53 : f32 to vector<16x128xf32>
    %154 = arith.addf %153, %152 : vector<16x128xf32>
    %155 = arith.mulf %149, %154 : vector<16x128xf32>
    %156 = arith.mulf %146, %155 : vector<16x128xf32>
    %c0_54 = arith.constant 0 : index
    %c0_55 = arith.constant 0 : index
    %c0_56 = arith.constant 0 : index
    %157 = vector.load %arg8[%c0_54, %c0_55, %c0_56] : memref<1x128x32xf32, #tpu.memory_space<vmem>>, vector<1x128x32xf32>
    %158 = vector.shape_cast %157 : vector<1x128x32xf32> to vector<128x32xf32>
    %cst_57 = arith.constant dense<0.000000e+00> : vector<16x32xf32>
    %159 = tpu.matmul %156, %158, %cst_57 {dimension_numbers = #tpu.dot_dimension_numbers<[1], [0], [0], [1], [0, 0, 1, 1], [], []>} : vector<16x128xf32>, vector<128x32xf32>, vector<16x32xf32> -> vector<16x32xf32>
    %160 = vector.broadcast %12 : vector<1x32xf32> to vector<16x32xf32>
    %161 = arith.addf %159, %160 : vector<16x32xf32>
    %162 = arith.addf %116, %161 : vector<16x32xf32>
    %c0_58 = arith.constant 0 : index
    %c0_59 = arith.constant 0 : index
    %163 = vector.load %arg9[%c0_58, %c0_59] : memref<16x32xf32, #tpu.memory_space<vmem>>, vector<16x32xf32>
    tpu.vector_store %arg9[%c0_58, %c0_59], %162 {strides = array<i32>} : memref<16x32xf32, #tpu.memory_space<vmem>>, vector<16x32xf32>,
    return
  }
  func.func @transform_0(%arg0: i32) -> (i32, i32) {
    %c0_i32 = arith.constant 0 : i32
    %c0_i32_0 = arith.constant 0 : i32
    %c0_i32_1 = arith.constant 0 : i32
    return %c0_i32, %c0_i32_0 : i32, i32
  }
  func.func @transform_1(%arg0: i32) -> (i32, i32) {
    %c0_i32 = arith.constant 0 : i32
    %c0_i32_0 = arith.constant 0 : i32
    %c0_i32_1 = arith.constant 0 : i32
    return %c0_i32, %c0_i32_0 : i32, i32
  }
  func.func @transform_2(%arg0: i32) -> (i32, i32, i32) {
    %c0_i32 = arith.constant 0 : i32
    %c0_i32_0 = arith.constant 0 : i32
    %c0_i32_1 = arith.constant 0 : i32
    return %arg0, %c0_i32, %c0_i32_0 : i32, i32, i32
  }
  func.func @transform_3(%arg0: i32) -> (i32, i32, i32) {
    %c0_i32 = arith.constant 0 : i32
    %c0_i32_0 = arith.constant 0 : i32
    %c0_i32_1 = arith.constant 0 : i32
    return %arg0, %c0_i32, %c0_i32_0 : i32, i32, i32
  }
  func.func @transform_4(%arg0: i32) -> (i32, i32, i32) {
    %c0_i32 = arith.constant 0 : i32
    %c0_i32_0 = arith.constant 0 : i32
    %c0_i32_1 = arith.constant 0 : i32
    return %arg0, %c0_i32, %c0_i32_0 : i32, i32, i32
  }
  func.func @transform_5(%arg0: i32) -> (i32, i32, i32) {
    %c0_i32 = arith.constant 0 : i32
    %c0_i32_0 = arith.constant 0 : i32
    %c0_i32_1 = arith.constant 0 : i32
    return %arg0, %c0_i32, %c0_i32_0 : i32, i32, i32
  }
  func.func @transform_6(%arg0: i32) -> (i32, i32, i32) {
    %c0_i32 = arith.constant 0 : i32
    %c0_i32_0 = arith.constant 0 : i32
    %c0_i32_1 = arith.constant 0 : i32
    return %arg0, %c0_i32, %c0_i32_0 : i32, i32, i32
  }
  func.func @transform_7(%arg0: i32) -> (i32, i32, i32) {
    %c0_i32 = arith.constant 0 : i32
    %c0_i32_0 = arith.constant 0 : i32
    %c0_i32_1 = arith.constant 0 : i32
    return %arg0, %c0_i32, %c0_i32_0 : i32, i32, i32
  }
  func.func @transform_8(%arg0: i32) -> (i32, i32) {
    %c0_i32 = arith.constant 0 : i32
    %c0_i32_0 = arith.constant 0 : i32
    %c0_i32_1 = arith.constant 0 : i32
    return %c0_i32, %c0_i32_0 : i32, i32
  }
}

</mosaic_0001>

<llo_original>
// kernel: tpu_custom_call.1
$region0: #{tpu_custom_call.1}
  #allocation0 [shape = 'u32[]', space=smem, size = 0x4, offset = 0x4, fixed_abs, tag = 'smem constant byte address 0x4 - core index']
  #allocation1 [shape = 'u32[144,128]{1,0:T(1,128)}', space=vmem, size = 0x12000, scoped, tag = 'internal scratch']
  %s0 = inlined_call_operand.vmem [shape: f32[16,32], index: 0, kind: input, shape index: {}]
  %s1 = inlined_call_operand.vmem [shape: f32[16,16], index: 1, kind: input, shape index: {}]
  %s2 = inlined_call_operand.vmem [shape: f32[2,32,192], index: 2, kind: input, shape index: {}]
  %s3 = inlined_call_operand.vmem [shape: f32[2,64,32], index: 3, kind: input, shape index: {}]
  %s4 = inlined_call_operand.vmem [shape: f32[2,6,32], index: 4, kind: input, shape index: {}]
  %s5 = inlined_call_operand.vmem [shape: f32[2,32,256], index: 5, kind: input, shape index: {}]
  %s6 = inlined_call_operand.vmem [shape: f32[2,1,256], index: 6, kind: input, shape index: {}]
  %s7 = inlined_call_operand.vmem [shape: f32[2,128,32], index: 7, kind: input, shape index: {}]
  %s8 = inlined_call_operand.hbm [shape: f32[16,32], index: 8, kind: output, shape index: {}]
  %s9 = sld [smem:[#allocation0]]
  $region69: #{tpu_custom_call.1} parent=0
    _
  %s11 = ssub.s32 1, %s9
  %s12 = scalar_select 0, %s11, %s9
  $region1: #{tpu_custom_call.1} parent=0
    #allocation2 [shape = 'u8[8192]{0}', space=vmem, size = 0x2000, scoped, tag = 'output window, operand 0, single buffered']
    #allocation3 [shape = 's32[2]{0}', space=sflag, size = 0x8, scoped, tag = 'scoped memory for tpu_custom_call.1']
    %13 = vsyncpa [#allocation3], 0
    loop: start=0, step=1, limit=4
    $region2: #{tpu_custom_call.1} parent=1 // loop_pre_header
      _
    $region3: #{tpu_custom_call.1} parent=1 // loop_header
      %s15 = sphi 0, %s19
      %p16 = scmp.ge.s32.totalorder %s15, 4
      %s23 = sphi 0, %s23
      %s25 = sphi 0, %s23
      %s26 = sphi 0, %s25
      %s40 = sphi 0, %s26
      %s44 = sphi 0, %s44
      %s46 = sphi 0, %s44
      %s47 = sphi 0, %s46
      %s61 = sphi 0, %s47
      %s67 = sphi 0, %s69
      %s70 = sphi 0, %s67
      %s71 = sphi 0, %s70
      %s87 = sphi 0, %s71
      %s93 = sphi 0, %s95
      %s96 = sphi 0, %s93
      %s97 = sphi 0, %s96
      %s113 = sphi 0, %s97
      %s119 = sphi 0, %s121
      %s122 = sphi 0, %s119
      %s123 = sphi 0, %s122
      %s139 = sphi 0, %s123
      %s145 = sphi 0, %s147
      %s148 = sphi 0, %s145
      %s149 = sphi 0, %s148
      %s165 = sphi 0, %s149
      %s171 = sphi 0, %s173
      %s174 = sphi 0, %s171
      %s175 = sphi 0, %s174
      %s191 = sphi 0, %s175
      %s197 = sphi 0, %s199
      %s200 = sphi 0, %s197
      %s201 = sphi 0, %s200
      %s217 = sphi 0, %s201
      %s221 = sphi 0, %s221
      %s223 = sphi 0, %s221
      %s224 = sphi 0, %s223
      %s238 = sphi 0, %s224
    $region4: #{tpu_custom_call.1} parent=1 // loop_header_branch
      %18 = sbr.rel (%p16) target = $region8
    $region5: #{tpu_custom_call.1} parent=1 // loop_body
      %s20 = ssub.s32 %s15, 1
      %s21 = ssub.s32 %s15, 2
      %s22 = sadd.s32 %s15, 1
      %s24 = sadd.s32 %s23, 1
      %p27 = scmp.eq.s32.totalorder %s15, 1
      %p28 = scmp.ne.s32.totalorder %s23, %s25
      %p29 = scmp.eq.s32.totalorder %s15, 0
      %p30 = por %p28, %p29
      %p31 = scmp.ne.s32.totalorder %s23, %s25
      %p32 = scmp.eq.s32.totalorder %s20, 1
      %p33 = por %p31, %p32
      %p34 = scmp.ne.s32.totalorder %s25, %s26
      %p35 = scmp.eq.s32.totalorder %s20, 0
      %p36 = por %p34, %p35
      %p37 = scmp.ne.s32.totalorder %s25, %s26
      %p38 = scmp.eq.s32.totalorder %s21, 1
      %p39 = por %p37, %p38
      %p41 = scmp.ne.s32.totalorder %s26, %s40
      %p42 = scmp.eq.s32.totalorder %s21, 0
      %p43 = por %p41, %p42
      %s45 = sadd.s32 %s44, 1
      %p48 = scmp.eq.s32.totalorder %s15, 1
      %p49 = scmp.ne.s32.totalorder %s44, %s46
      %p50 = scmp.eq.s32.totalorder %s15, 0
      %p51 = por %p49, %p50
      %p52 = scmp.ne.s32.totalorder %s44, %s46
      %p53 = scmp.eq.s32.totalorder %s20, 1
      %p54 = por %p52, %p53
      %p55 = scmp.ne.s32.totalorder %s46, %s47
      %p56 = scmp.eq.s32.totalorder %s20, 0
      %p57 = por %p55, %p56
      %p58 = scmp.ne.s32.totalorder %s46, %s47
      %p59 = scmp.eq.s32.totalorder %s21, 1
      %p60 = por %p58, %p59
      %p62 = scmp.ne.s32.totalorder %s47, %s61
      %p63 = scmp.eq.s32.totalorder %s21, 0
      %p64 = por %p62, %p63
      %s65 = ssub.s32 %s15, %s22
      %p66 = scmp.eq.s32.totalorder %s65, 0
      %s68 = sadd.s32 %s67, 1
      %s69 = scalar_select %p66, %s67, %s68
      %p72 = pneg %p66
      %p73 = scmp.eq.s32.totalorder %s15, 1
      %p74 = por %p72, %p73
      %p75 = scmp.ne.s32.totalorder %s67, %s70
      %p76 = scmp.eq.s32.totalorder %s15, 0
      %p77 = por %p75, %p76
      %p78 = scmp.ne.s32.totalorder %s67, %s70
      %p79 = scmp.eq.s32.totalorder %s20, 1
      %p80 = por %p78, %p79
      %p81 = scmp.ne.s32.totalorder %s70, %s71
      %p82 = scmp.eq.s32.totalorder %s20, 0
      %p83 = por %p81, %p82
      %p84 = scmp.ne.s32.totalorder %s70, %s71
      %p85 = scmp.eq.s32.totalorder %s21, 1
      %p86 = por %p84, %p85
      %p88 = scmp.ne.s32.totalorder %s71, %s87
      %p89 = scmp.eq.s32.totalorder %s21, 0
      %p90 = por %p88, %p89
      %s91 = ssub.s32 %s15, %s22
      %p92 = scmp.eq.s32.totalorder %s91, 0
      %s94 = sadd.s32 %s93, 1
      %s95 = scalar_select %p92, %s93, %s94
      %p98 = pneg %p92
      %p99 = scmp.eq.s32.totalorder %s15, 1
      %p100 = por %p98, %p99
      %p101 = scmp.ne.s32.totalorder %s93, %s96
      %p102 = scmp.eq.s32.totalorder %s15, 0
      %p103 = por %p101, %p102
      %p104 = scmp.ne.s32.totalorder %s93, %s96
      %p105 = scmp.eq.s32.totalorder %s20, 1
      %p106 = por %p104, %p105
      %p107 = scmp.ne.s32.totalorder %s96, %s97
      %p108 = scmp.eq.s32.totalorder %s20, 0
      %p109 = por %p107, %p108
      %p110 = scmp.ne.s32.totalorder %s96, %s97
      %p111 = scmp.eq.s32.totalorder %s21, 1
      %p112 = por %p110, %p111
      %p114 = scmp.ne.s32.totalorder %s97, %s113
      %p115 = scmp.eq.s32.totalorder %s21, 0
      %p116 = por %p114, %p115
      %s117 = ssub.s32 %s15, %s22
      %p118 = scmp.eq.s32.totalorder %s117, 0
      %s120 = sadd.s32 %s119, 1
      %s121 = scalar_select %p118, %s119, %s120
      %p124 = pneg %p118
      %p125 = scmp.eq.s32.totalorder %s15, 1
      %p126 = por %p124, %p125
      %p127 = scmp.ne.s32.totalorder %s119, %s122
      %p128 = scmp.eq.s32.totalorder %s15, 0
      %p129 = por %p127, %p128
      %p130 = scmp.ne.s32.totalorder %s119, %s122
      %p131 = scmp.eq.s32.totalorder %s20, 1
      %p132 = por %p130, %p131
      %p133 = scmp.ne.s32.totalorder %s122, %s123
      %p134 = scmp.eq.s32.totalorder %s20, 0
      %p135 = por %p133, %p134
      %p136 = scmp.ne.s32.totalorder %s122, %s123
      %p137 = scmp.eq.s32.totalorder %s21, 1
      %p138 = por %p136, %p137
      %p140 = scmp.ne.s32.totalorder %s123, %s139
      %p141 = scmp.eq.s32.totalorder %s21, 0
      %p142 = por %p140, %p141
      %s143 = ssub.s32 %s15, %s22
      %p144 = scmp.eq.s32.totalorder %s143, 0
      %s146 = sadd.s32 %s145, 1
      %s147 = scalar_select %p144, %s145, %s146
      %p150 = pneg %p144
      %p151 = scmp.eq.s32.totalorder %s15, 1
      %p152 = por %p150, %p151
      %p153 = scmp.ne.s32.totalorder %s145, %s148
      %p154 = scmp.eq.s32.totalorder %s15, 0
      %p155 = por %p153, %p154
      %p156 = scmp.ne.s32.totalorder %s145, %s148
      %p157 = scmp.eq.s32.totalorder %s20, 1
      %p158 = por %p156, %p157
      %p159 = scmp.ne.s32.totalorder %s148, %s149
      %p160 = scmp.eq.s32.totalorder %s20, 0
      %p161 = por %p159, %p160
      %p162 = scmp.ne.s32.totalorder %s148, %s149
      %p163 = scmp.eq.s32.totalorder %s21, 1
      %p164 = por %p162, %p163
      %p166 = scmp.ne.s32.totalorder %s149, %s165
      %p167 = scmp.eq.s32.totalorder %s21, 0
      %p168 = por %p166, %p167
      %s169 = ssub.s32 %s15, %s22
      %p170 = scmp.eq.s32.totalorder %s169, 0
      %s172 = sadd.s32 %s171, 1
      %s173 = scalar_select %p170, %s171, %s172
      %p176 = pneg %p170
      %p177 = scmp.eq.s32.totalorder %s15, 1
      %p178 = por %p176, %p177
      %p179 = scmp.ne.s32.totalorder %s171, %s174
      %p180 = scmp.eq.s32.totalorder %s15, 0
      %p181 = por %p179, %p180
      %p182 = scmp.ne.s32.totalorder %s171, %s174
      %p183 = scmp.eq.s32.totalorder %s20, 1
      %p184 = por %p182, %p183
      %p185 = scmp.ne.s32.totalorder %s174, %s175
      %p186 = scmp.eq.s32.totalorder %s20, 0
      %p187 = por %p185, %p186
      %p188 = scmp.ne.s32.totalorder %s174, %s175
      %p189 = scmp.eq.s32.totalorder %s21, 1
      %p190 = por %p188, %p189
      %p192 = scmp.ne.s32.totalorder %s175, %s191
      %p193 = scmp.eq.s32.totalorder %s21, 0
      %p194 = por %p192, %p193
      %s195 = ssub.s32 %s15, %s22
      %p196 = scmp.eq.s32.totalorder %s195, 0
      %s198 = sadd.s32 %s197, 1
      %s199 = scalar_select %p196, %s197, %s198
      %p202 = pneg %p196
      %p203 = scmp.eq.s32.totalorder %s15, 1
      %p204 = por %p202, %p203
      %p205 = scmp.ne.s32.totalorder %s197, %s200
      %p206 = scmp.eq.s32.totalorder %s15, 0
      %p207 = por %p205, %p206
      %p208 = scmp.ne.s32.totalorder %s197, %s200
      %p209 = scmp.eq.s32.totalorder %s20, 1
      %p210 = por %p208, %p209
      %p211 = scmp.ne.s32.totalorder %s200, %s201
      %p212 = scmp.eq.s32.totalorder %s20, 0
      %p213 = por %p211, %p212
      %p214 = scmp.ne.s32.totalorder %s200, %s201
      %p215 = scmp.eq.s32.totalorder %s21, 1
      %p216 = por %p214, %p215
      %p218 = scmp.ne.s32.totalorder %s201, %s217
      %p219 = scmp.eq.s32.totalorder %s21, 0
      %p220 = por %p218, %p219
      %s222 = sadd.s32 %s221, 1
      %p225 = scmp.eq.s32.totalorder %s15, 1
      %p226 = scmp.ne.s32.totalorder %s221, %s223
      %p227 = scmp.eq.s32.totalorder %s15, 0
      %p228 = por %p226, %p227
      %p229 = scmp.ne.s32.totalorder %s221, %s223
      %p230 = scmp.eq.s32.totalorder %s20, 1
      %p231 = por %p229, %p230
      %p232 = scmp.ne.s32.totalorder %s223, %s224
      %p233 = scmp.eq.s32.totalorder %s20, 0
      %p234 = por %p232, %p233
      %p235 = scmp.ne.s32.totalorder %s223, %s224
      %p236 = scmp.eq.s32.totalorder %s21, 1
      %p237 = por %p235, %p236
      %p239 = scmp.ne.s32.totalorder %s224, %s238
      %p240 = scmp.eq.s32.totalorder %s21, 0
      %p241 = por %p239, %p240
      %p242 = scmp.le.s32.totalorder 1, %s15
      %p243 = scmp.lt.s32.totalorder %s15, 3
      %p244 = pnand %p242, %p243
      %p245 = pneg %p244
      // Predicated region
      $region9: #{tpu_custom_call.1} parent=5 // pred_check
        _
      $region10: #{tpu_custom_call.1} parent=5 // pred_check_branch
        %247 = sbr.rel (%p244) target = $region12
      $region11: #{tpu_custom_call.1} parent=5 // pred_region
        %s248 = ssub.s32 %s15, 1
        // Predicated region
        $region13: #{tpu_custom_call.1} parent=11 // pred_check
          %p249 = pneg %p36
        $region14: #{tpu_custom_call.1} parent=11 // pred_check_branch
          %251 = sbr.rel (%p249) target = $region16
        $region15: #{tpu_custom_call.1} parent=11 // pred_region
          _
        $region16: #{tpu_custom_call.1} parent=11 // pred_fallthru
          _
        // Predicated region
        $region17: #{tpu_custom_call.1} parent=11 // pred_check
          %p252 = pneg %p57
        $region18: #{tpu_custom_call.1} parent=11 // pred_check_branch
          %254 = sbr.rel (%p252) target = $region20
        $region19: #{tpu_custom_call.1} parent=11 // pred_region
          _
        $region20: #{tpu_custom_call.1} parent=11 // pred_fallthru
          _
      $region12: #{tpu_custom_call.1} parent=5 // pred_fallthru
        _
      %p255 = scmp.lt.s32.totalorder %s15, 2
      // Predicated region
      $region21: #{tpu_custom_call.1} parent=5 // pred_check
        %p256 = pneg %p255
      $region22: #{tpu_custom_call.1} parent=5 // pred_check_branch
        %258 = sbr.rel (%p256) target = $region24
      $region23: #{tpu_custom_call.1} parent=5 // pred_region
        // Predicated region
        $region25: #{tpu_custom_call.1} parent=23 // pred_check
          %p259 = pneg %p77
        $region26: #{tpu_custom_call.1} parent=23 // pred_check_branch
          %261 = sbr.rel (%p259) target = $region28
        $region27: #{tpu_custom_call.1} parent=23 // pred_region
          %p262 = scmp.lt.s32.totalorder %s15, 1
          %s263 = scalar_select %p262, %s15, 1
          %s264 = smul.addr %s263, 8
          %s265 = smul.addr %s264, 8
          %s266 = scalar_lea.vmem %s2, %s265
        $region28: #{tpu_custom_call.1} parent=23 // pred_fallthru
          _
        // Predicated region
        $region29: #{tpu_custom_call.1} parent=23 // pred_check
          %p267 = pneg %p103
        $region30: #{tpu_custom_call.1} parent=23 // pred_check_branch
          %269 = sbr.rel (%p267) target = $region32
        $region31: #{tpu_custom_call.1} parent=23 // pred_region
          %p270 = scmp.lt.s32.totalorder %s15, 1
          %s271 = scalar_select %p270, %s15, 1
          %s272 = smul.addr %s271, 8
          %s273 = smul.addr %s272, 8
          %s274 = scalar_lea.vmem %s3, %s273
        $region32: #{tpu_custom_call.1} parent=23 // pred_fallthru
          _
        // Predicated region
        $region33: #{tpu_custom_call.1} parent=23 // pred_check
          %p275 = pneg %p129
        $region34: #{tpu_custom_call.1} parent=23 // pred_check_branch
          %277 = sbr.rel (%p275) target = $region36
        $region35: #{tpu_custom_call.1} parent=23 // pred_region
          %p278 = scmp.lt.s32.totalorder %s15, 1
          %s279 = scalar_select %p278, %s15, 1
          %s280 = smul.addr %s279, 8
          %s281 = scalar_lea.vmem %s4, %s280
        $region36: #{tpu_custom_call.1} parent=23 // pred_fallthru
          _
        // Predicated region
        $region37: #{tpu_custom_call.1} parent=23 // pred_check
          %p282 = pneg %p155
        $region38: #{tpu_custom_call.1} parent=23 // pred_check_branch
          %284 = sbr.rel (%p282) target = $region40
        $region39: #{tpu_custom_call.1} parent=23 // pred_region
          %p285 = scmp.lt.s32.totalorder %s15, 1
          %s286 = scalar_select %p285, %s15, 1
          %s287 = smul.addr %s286, 8
          %s288 = smul.addr %s287, 8
          %s289 = scalar_lea.vmem %s5, %s288
        $region40: #{tpu_custom_call.1} parent=23 // pred_fallthru
          _
        // Predicated region
        $region41: #{tpu_custom_call.1} parent=23 // pred_check
          %p290 = pneg %p181
        $region42: #{tpu_custom_call.1} parent=23 // pred_check_branch
          %292 = sbr.rel (%p290) target = $region44
        $region43: #{tpu_custom_call.1} parent=23 // pred_region
          %p293 = scmp.lt.s32.totalorder %s15, 1
          %s294 = scalar_select %p293, %s15, 1
          %s295 = smul.addr %s294, 2
          %s296 = scalar_lea.vmem %s6, %s295
        $region44: #{tpu_custom_call.1} parent=23 // pred_fallthru
          _
        // Predicated region
        $region45: #{tpu_custom_call.1} parent=23 // pred_check
          %p297 = pneg %p207
        $region46: #{tpu_custom_call.1} parent=23 // pred_check_branch
          %299 = sbr.rel (%p297) target = $region48
        $region47: #{tpu_custom_call.1} parent=23 // pred_region
          %p300 = scmp.lt.s32.totalorder %s15, 1
          %s301 = scalar_select %p300, %s15, 1
          %s302 = smul.addr %s301, 16
          %s303 = smul.addr %s302, 8
          %s304 = scalar_lea.vmem %s7, %s303
        $region48: #{tpu_custom_call.1} parent=23 // pred_fallthru
          _
      $region24: #{tpu_custom_call.1} parent=5 // pred_fallthru
        _
      %p305 = scmp.le.s32.totalorder 1, %s15
      %p306 = scmp.lt.s32.totalorder %s15, 3
      %p307 = pnand %p305, %p306
      %p308 = pneg %p307
      // Predicated region
      $region49: #{tpu_custom_call.1} parent=5 // pred_check
        _
      $region50: #{tpu_custom_call.1} parent=5 // pred_check_branch
        %310 = sbr.rel (%p307) target = $region52
      $region51: #{tpu_custom_call.1} parent=5 // pred_region
        %s311 = ssub.s32 %s15, 1
        %p312 = pneg %p36
        %p313 = pneg %p33
        %p314 = pneg %p57
        %p315 = pneg %p54
        %p316 = scmp.lt.s32.totalorder %s20, 1
        %s317 = scalar_select %p316, %s20, 1
        %s318 = smul.addr %s317, 8
        %s319 = smul.addr %s318, 8
        %s320 = scalar_lea.vmem %s2, %s319
        %p321 = pneg %p83
        %p322 = pneg %p80
        %p323 = scmp.lt.s32.totalorder %s20, 1
        %s324 = scalar_select %p323, %s20, 1
        %s325 = smul.addr %s324, 8
        %s326 = smul.addr %s325, 8
        %s327 = scalar_lea.vmem %s3, %s326
        %p328 = pneg %p109
        %p329 = pneg %p106
        %p330 = scmp.lt.s32.totalorder %s20, 1
        %s331 = scalar_select %p330, %s20, 1
        %s332 = smul.addr %s331, 8
        %s333 = scalar_lea.vmem %s4, %s332
        %p334 = pneg %p135
        %p335 = pneg %p132
        %p336 = scmp.lt.s32.totalorder %s20, 1
        %s337 = scalar_select %p336, %s20, 1
        %s338 = smul.addr %s337, 8
        %s339 = smul.addr %s338, 8
        %s340 = scalar_lea.vmem %s5, %s339
        %p341 = pneg %p161
        %p342 = pneg %p158
        %p343 = scmp.lt.s32.totalorder %s20, 1
        %s344 = scalar_select %p343, %s20, 1
        %s345 = smul.addr %s344, 2
        %s346 = scalar_lea.vmem %s6, %s345
        %p347 = pneg %p187
        %p348 = pneg %p184
        %p349 = scmp.lt.s32.totalorder %s20, 1
        %s350 = scalar_select %p349, %s20, 1
        %s351 = smul.addr %s350, 16
        %s352 = smul.addr %s351, 8
        %s353 = scalar_lea.vmem %s7, %s352
        %p354 = pneg %p213
        %p355 = pneg %p210
        %p356 = pneg %p234
        %p357 = pneg %p231
        %p358 = scmp.lt.s32.totalorder %s20, 1
        %s359 = scalar_select %p358, %s20, 1
        %s360 = smul.addr %s359, 8
        %s361 = smul.addr %s360, 8
        %s362 = scalar_lea.vmem %s2, %s361
        %p363 = scmp.lt.s32.totalorder %s20, 1
        %s364 = scalar_select %p363, %s20, 1
        %s365 = smul.addr %s364, 8
        %s366 = smul.addr %s365, 8
        %s367 = scalar_lea.vmem %s3, %s366
        %p368 = scmp.lt.s32.totalorder %s20, 1
        %s369 = scalar_select %p368, %s20, 1
        %s370 = smul.addr %s369, 8
        %s371 = scalar_lea.vmem %s4, %s370
        %p372 = scmp.lt.s32.totalorder %s20, 1
        %s373 = scalar_select %p372, %s20, 1
        %s374 = smul.addr %s373, 8
        %s375 = smul.addr %s374, 8
        %s376 = scalar_lea.vmem %s5, %s375
        %p377 = scmp.lt.s32.totalorder %s20, 1
        %s378 = scalar_select %p377, %s20, 1
        %s379 = smul.addr %s378, 2
        %s380 = scalar_lea.vmem %s6, %s379
        %p381 = scmp.lt.s32.totalorder %s20, 1
        %s382 = scalar_select %p381, %s20, 1
        %s383 = smul.addr %s382, 16
        %s384 = smul.addr %s383, 8
        %s385 = scalar_lea.vmem %s7, %s384
        %p386 = scmp.eq.s32.totalorder %s20, 0
        // Predicated region
        $region53: #{tpu_custom_call.1} parent=51 // pred_check
          %p387 = pneg %p386
        $region54: #{tpu_custom_call.1} parent=51 // pred_check_branch
          %389 = sbr.rel (%p387) target = $region56
        $region55: #{tpu_custom_call.1} parent=51 // pred_region
          %v390 = vld [vmem:[%s0] sm:$0xff]
          %v391 = vld [vmem:[%s0 + $0x8] sm:$0xff]
          %vm392 = vcmask 261120
          %393 = vst.msk [vmem:[#allocation2] sm:$0xff] %vm392, %v390
          %394 = vst.msk [vmem:[#allocation2 + $0x8] sm:$0xff] %vm392, %v391
        $region56: #{tpu_custom_call.1} parent=51 // pred_fallthru
          _
        %v395 = vld [vmem:[#allocation2] sm:$0xff]
        %v396 = vld [vmem:[#allocation2 + $0x8] sm:$0xff]
        %v397 = vld [vmem:[%s1] sm:$0xff]
        %v398 = vld [vmem:[%s1 + $0x8] sm:$0xff]
        %v399 = vld [vmem:[%s371] sm:$0x3f]
        %vm400 = vcmask 261120
        %v401 = vsel %vm400, %v395, 0.0
        %402 = vadd.xlane.f32.xlu0 %v401
        %v403 = vpop.xlane.xlu0 %402
        %v404 = vsel %vm400, %v396, 0.0
        %405 = vadd.xlane.f32.xlu0 %v404
        %v406 = vpop.xlane.xlu0 %405
        %v407 = vrcp.pop 32.0
        %v408 = vmul.f32 %v403, %v407
        %v409 = vmul.f32 %v406, %v407
        %v410 = vsub.f32 %v395, %v408
        %v411 = vsub.f32 %v396, %v409
        %v412 = vmul.f32 %v410, %v410
        %v413 = vmul.f32 %v411, %v411
        %v414 = vsel %vm400, %v412, 0.0
        %415 = vadd.xlane.f32.xlu0 %v414
        %v416 = vpop.xlane.xlu0 %415
        %v417 = vsel %vm400, %v413, 0.0
        %418 = vadd.xlane.f32.xlu0 %v417
        %v419 = vpop.xlane.xlu0 %418
        %v420 = vmul.f32 %v416, %v407
        %v421 = vmul.f32 %v419, %v407
        %v422 = vadd.f32 %v420, 1e-05
        %v423 = vadd.f32 %v421, 1e-05
        %v424 = vrsqrt.pop %v422
        %v425 = vrsqrt.pop %v423
        %v426 = vmul.f32 %v410, %v424
        %v427 = vmul.f32 %v411, %v425
        %v428 = vlaneseq
        %v429 = vshrl.u32 %v428, 7
        %v430 = vsub.s32 0, %v429
        %v431 = vrot.slane %v399, %v430
        %v432 = vmul.f32 %v426, %v431
        %v433 = vmul.f32 %v427, %v431
        %v434 = vlaneseq
        %v435 = vshrl.u32 %v434, 7
        %v436 = vsub.s32 1, %v435
        %v437 = vrot.slane %v399, %v436
        %v438 = vadd.f32 %v432, %v437
        %v439 = vadd.f32 %v433, %v437
        %v440 = vld [vmem:[%s362] sm:$0xff]
        %v441 = vld [vmem:[%s362 + $0x8] sm:$0xff]
        %v442 = vld [vmem:[%s362 + $0x10] sm:$0xff]
        %v443 = vld [vmem:[%s362 + $0x18] sm:$0xff]
        %v444 = vld [vmem:[%s362 + $0x20] sm:$0xff]
        %v445 = vld [vmem:[%s362 + $0x28] sm:$0xff]
        %v446 = vld [vmem:[%s362 + $0x30] sm:$0xff]
        %v447 = vld [vmem:[%s362 + $0x38] sm:$0xff]
        %v449 = vsel %vm400, %v438, 0
        %v452 = vsel %vm400, %v439, 0
        %454 = vmatprep.subr.mxu0 %v441
        %455 = vmatpush1.msra.mxu0 %v440
        %456 = vmatprep.subr.mxu0 %v443
        %457 = vmatpush1.msra.mxu0 %v442
        %458 = vmatprep.subr.mxu0 %v445
        %459 = vmatpush1.msra.mxu0 %v444
        %460 = vmatprep.subr.mxu0 %v447
        %461 = vmatpush1.msra.mxu0 %v446
        %462 = vmatprep.subr.mxu0 0.0
        %463 = vmatpush1.msra.mxu0 0.0
        %464 = vmatprep.subr.mxu0 0.0
        %465 = vmatpush1.msra.mxu0 0.0
        %466 = vmatprep.subr.mxu0 0.0
        %467 = vmatpush1.msra.mxu0 0.0
        %468 = vmatprep.subr.mxu0 0.0
        %469 = vmatpush1.msra.mxu0 0.0
        %470 = vmatprep.subr.mxu0 0.0
        %471 = vmatpush1.msra.mxu0 0.0
        %472 = vmatprep.subr.mxu0 0.0
        %473 = vmatpush1.msra.mxu0 0.0
        %474 = vmatprep.subr.mxu0 0.0
        %475 = vmatpush1.msra.mxu0 0.0
        %476 = vmatprep.subr.mxu0 0.0
        %477 = vmatpush1.msra.mxu0 0.0
        %478 = vmatprep.subr.mxu0 0.0
        %479 = vmatpush1.msra.mxu0 0.0
        %480 = vmatprep.subr.mxu0 0.0
        %481 = vmatpush1.msra.mxu0 0.0
        %482 = vmatprep.subr.mxu0 0.0
        %483 = vmatpush1.msra.mxu0 0.0
        %484 = vmatprep.subr.mxu0 0.0
        %485 = vmatpush1.msra.mxu0 0.0
        %486 = vmatprep.subr.mxu0 0.0
        %487 = vmatpush1.msra.mxu0 0.0
        %488 = vmatprep.subr.mxu0 0.0
        %489 = vmatpush1.msra.mxu0 0.0
        %490 = vmatprep.subr.mxu0 0.0
        %491 = vmatpush1.msra.mxu0 0.0
        %492 = vmatprep.subr.mxu0 0.0
        %493 = vmatpush1.msra.mxu0 0.0
        %494 = vmatprep.subr.mxu0 0.0
        %495 = vmatpush1.msra.mxu0 0.0
        %496 = vmatprep.subr.mxu0 0.0
        %497 = vmatpush1.msra.mxu0 0.0
        %498 = vmatprep.subr.mxu0 0.0
        %499 = vmatpush1.msra.mxu0 0.0
        %500 = vmatprep.subr.mxu0 0.0
        %501 = vmatpush1.msra.mxu0 0.0
        %502 = vmatprep.subr.mxu0 0.0
        %503 = vmatpush1.msra.mxu0 0.0
        %504 = vmatprep.subr.mxu0 0.0
        %505 = vmatpush1.msra.mxu0 0.0
        %506 = vmatprep.subr.mxu0 0.0
        %507 = vmatpush1.msra.mxu0 0.0
        %508 = vmatprep.subr.mxu0 0.0
        %509 = vmatpush1.msra.mxu0 0.0
        %510 = vmatprep.subr.mxu0 0.0
        %511 = vmatpush1.msra.mxu0 0.0
        %512 = vmatprep.subr.mxu0 0.0
        %513 = vmatpush1.msra.mxu0 0.0
        %514 = vmatprep.subr.mxu0 0.0
        %515 = vmatpush1.msra.mxu0 0.0
        %516 = vmatprep.subr.mxu0 0.0
        %517 = vmatpush1.msra.mxu0 0.0
        %518 = vmatprep.mubr.f32.mxu0 0.0
        %519 = vmatmul.mubr.f32.gmra.mrb[0].mxu0 %v449
        %v520 = vpop.f32.mrb[0].mxu0
        %v521 = vadd.f32 0.0, %v520
        %v522 = vpop.f32.mrb[0].mxu0
        %v523 = vadd.f32 0.0, %v522
        %524 = vmatprep.mubr.f32.mxu0 0.0
        %525 = vmatmul.mubr.f32.gmra.mrb[0].mxu0 %v452
        %v526 = vpop.f32.mrb[0].mxu0
        %v527 = vadd.f32 0.0, %v526
        %v528 = vpop.f32.mrb[0].mxu0
        %v529 = vadd.f32 0.0, %v528
        %530 = vdwg.mxu0
        %533 = vrot.lane.b32.xlu0 %v521, 64
        %v534 = vpop.permute.xlu0 %533
        %535 = vrot.lane.b32.xlu0 %v527, 64
        %v536 = vpop.permute.xlu0 %535
        %vm537 = vcmask 130048
        %v538 = vsel %vm537, %v521, 0
        %v540 = vsel %vm537, %v527, 0
        %v542 = vsel %vm537, %v534, 0
        %v544 = vsel %vm537, %v536, 0
        %546 = vmatprep.subr.mxu0 0.0
        %547 = vmatpush1.xpose.msra.mxu0 %v542
        %548 = vmatprep.subr.mxu0 0.0
        %549 = vmatpush1.xpose.msra.mxu0 %v544
        %550 = vmatprep.subr.mxu0 0.0
        %551 = vmatpush1.xpose.msra.mxu0 0.0
        %552 = vmatprep.subr.mxu0 0.0
        %553 = vmatpush1.xpose.msra.mxu0 0.0
        %554 = vmatprep.subr.mxu0 0.0
        %555 = vmatpush1.xpose.msra.mxu0 0.0
        %556 = vmatprep.subr.mxu0 0.0
        %557 = vmatpush1.xpose.msra.mxu0 0.0
        %558 = vmatprep.subr.mxu0 0.0
        %559 = vmatpush1.xpose.msra.mxu0 0.0
        %560 = vmatprep.subr.mxu0 0.0
        %561 = vmatpush1.xpose.msra.mxu0 0.0
        %562 = vmatprep.subr.mxu0 0.0
        %563 = vmatpush1.xpose.msra.mxu0 0.0
        %564 = vmatprep.subr.mxu0 0.0
        %565 = vmatpush1.xpose.msra.mxu0 0.0
        %566 = vmatprep.subr.mxu0 0.0
        %567 = vmatpush1.xpose.msra.mxu0 0.0
        %568 = vmatprep.subr.mxu0 0.0
        %569 = vmatpush1.xpose.msra.mxu0 0.0
        %570 = vmatprep.subr.mxu0 0.0
        %571 = vmatpush1.xpose.msra.mxu0 0.0
        %572 = vmatprep.subr.mxu0 0.0
        %573 = vmatpush1.xpose.msra.mxu0 0.0
        %574 = vmatprep.subr.mxu0 0.0
        %575 = vmatpush1.xpose.msra.mxu0 0.0
        %576 = vmatprep.subr.mxu0 0.0
        %577 = vmatpush1.xpose.msra.mxu0 0.0
        %578 = vmatprep.subr.mxu0 0.0
        %579 = vmatpush1.xpose.msra.mxu0 0.0
        %580 = vmatprep.subr.mxu0 0.0
        %581 = vmatpush1.xpose.msra.mxu0 0.0
        %582 = vmatprep.subr.mxu0 0.0
        %583 = vmatpush1.xpose.msra.mxu0 0.0
        %584 = vmatprep.subr.mxu0 0.0
        %585 = vmatpush1.xpose.msra.mxu0 0.0
        %586 = vmatprep.subr.mxu0 0.0
        %587 = vmatpush1.xpose.msra.mxu0 0.0
        %588 = vmatprep.subr.mxu0 0.0
        %589 = vmatpush1.xpose.msra.mxu0 0.0
        %590 = vmatprep.subr.mxu0 0.0
        %591 = vmatpush1.xpose.msra.mxu0 0.0
        %592 = vmatprep.subr.mxu0 0.0
        %593 = vmatpush1.xpose.msra.mxu0 0.0
        %594 = vmatprep.subr.mxu0 0.0
        %595 = vmatpush1.xpose.msra.mxu0 0.0
        %596 = vmatprep.subr.mxu0 0.0
        %597 = vmatpush1.xpose.msra.mxu0 0.0
        %598 = vmatprep.subr.mxu0 0.0
        %599 = vmatpush1.xpose.msra.mxu0 0.0
        %600 = vmatprep.subr.mxu0 0.0
        %601 = vmatpush1.xpose.msra.mxu0 0.0
        %602 = vmatprep.subr.mxu0 0.0
        %603 = vmatpush1.xpose.msra.mxu0 0.0
        %604 = vmatprep.subr.mxu0 0.0
        %605 = vmatpush1.xpose.msra.mxu0 0.0
        %606 = vmatprep.subr.mxu0 0.0
        %607 = vmatpush1.xpose.msra.mxu0 0.0
        %608 = vmatprep.subr.mxu0 0.0
        %609 = vmatpush1.xpose.msra.mxu0 0.0
        %610 = vmatprep.mubr.f32.mxu0 0.0
        %611 = vmatmul.mubr.f32.gmra.mrb[0].mxu0 %v538
        %v612 = vpop.f32.mrb[0].mxu0
        %v613 = vadd.f32 0.0, %v612
        %v614 = vpop.f32.mrb[0].mxu0
        %615 = vmatprep.mubr.f32.mxu0 0.0
        %616 = vmatmul.mubr.f32.gmra.mrb[0].mxu0 %v540
        %v617 = vpop.f32.mrb[0].mxu0
        %v618 = vadd.f32 0.0, %v617
        %v619 = vpop.f32.mrb[0].mxu0
        %620 = vdwg.mxu0
        %v621 = vmul.f32 %v613, 0.25
        %v622 = vmul.f32 %v618, 0.25
        %v623 = vadd.f32 %v621, %v397
        %v624 = vadd.f32 %v622, %v398
        %v625 = vsel %vm537, %v623, -inf
        %626 = vmax.xlane.f32.xlu0 %v625
        %v627 = vpop.xlane.xlu0 %626
        %v628 = vsel %vm537, %v624, -inf
        %629 = vmax.xlane.f32.xlu0 %v628
        %v630 = vpop.xlane.xlu0 %629
        %v631 = vsub.f32 %v623, %v627
        %v632 = vsub.f32 %v624, %v630
        %v633 = vmul.f32 %v631, 1.442695
        %v634 = vpow.pop %v633
        %v635 = vmul.f32 %v632, 1.442695
        %v636 = vpow.pop %v635
        %v637 = vsel %vm537, %v634, 0.0
        %638 = vadd.xlane.f32.xlu0 %v637
        %v639 = vpop.xlane.xlu0 %638
        %v640 = vsel %vm537, %v636, 0.0
        %641 = vadd.xlane.f32.xlu0 %v640
        %v642 = vpop.xlane.xlu0 %641
        %v643 = vrcp.pop %v639
        %v644 = vmul.f32 %v634, %v643
        %v645 = vrcp.pop %v642
        %v646 = vmul.f32 %v636, %v645
        %v648 = vsel %vm537, %v644, 0
        %v651 = vsel %vm537, %v646, 0
        %653 = vmatprep.subr.mxu0 0.0
        %654 = vmatpush1.msra.mxu0 %v523
        %655 = vmatprep.subr.mxu0 0.0
        %656 = vmatpush1.msra.mxu0 %v529
        %657 = vmatprep.subr.mxu0 0.0
        %658 = vmatpush1.msra.mxu0 0.0
        %659 = vmatprep.subr.mxu0 0.0
        %660 = vmatpush1.msra.mxu0 0.0
        %661 = vmatprep.subr.mxu0 0.0
        %662 = vmatpush1.msra.mxu0 0.0
        %663 = vmatprep.subr.mxu0 0.0
        %664 = vmatpush1.msra.mxu0 0.0
        %665 = vmatprep.subr.mxu0 0.0
        %666 = vmatpush1.msra.mxu0 0.0
        %667 = vmatprep.subr.mxu0 0.0
        %668 = vmatpush1.msra.mxu0 0.0
        %669 = vmatprep.subr.mxu0 0.0
        %670 = vmatpush1.msra.mxu0 0.0
        %671 = vmatprep.subr.mxu0 0.0
        %672 = vmatpush1.msra.mxu0 0.0
        %673 = vmatprep.subr.mxu0 0.0
        %674 = vmatpush1.msra.mxu0 0.0
        %675 = vmatprep.subr.mxu0 0.0
        %676 = vmatpush1.msra.mxu0 0.0
        %677 = vmatprep.subr.mxu0 0.0
        %678 = vmatpush1.msra.mxu0 0.0
        %679 = vmatprep.subr.mxu0 0.0
        %680 = vmatpush1.msra.mxu0 0.0
        %681 = vmatprep.subr.mxu0 0.0
        %682 = vmatpush1.msra.mxu0 0.0
        %683 = vmatprep.subr.mxu0 0.0
        %684 = vmatpush1.msra.mxu0 0.0
        %685 = vmatprep.subr.mxu0 0.0
        %686 = vmatpush1.msra.mxu0 0.0
        %687 = vmatprep.subr.mxu0 0.0
        %688 = vmatpush1.msra.mxu0 0.0
        %689 = vmatprep.subr.mxu0 0.0
        %690 = vmatpush1.msra.mxu0 0.0
        %691 = vmatprep.subr.mxu0 0.0
        %692 = vmatpush1.msra.mxu0 0.0
        %693 = vmatprep.subr.mxu0 0.0
        %694 = vmatpush1.msra.mxu0 0.0
        %695 = vmatprep.subr.mxu0 0.0
        %696 = vmatpush1.msra.mxu0 0.0
        %697 = vmatprep.subr.mxu0 0.0
        %698 = vmatpush1.msra.mxu0 0.0
        %699 = vmatprep.subr.mxu0 0.0
        %700 = vmatpush1.msra.mxu0 0.0
        %701 = vmatprep.subr.mxu0 0.0
        %702 = vmatpush1.msra.mxu0 0.0
        %703 = vmatprep.subr.mxu0 0.0
        %704 = vmatpush1.msra.mxu0 0.0
        %705 = vmatprep.subr.mxu0 0.0
        %706 = vmatpush1.msra.mxu0 0.0
        %707 = vmatprep.subr.mxu0 0.0
        %708 = vmatpush1.msra.mxu0 0.0
        %709 = vmatprep.subr.mxu0 0.0
        %710 = vmatpush1.msra.mxu0 0.0
        %711 = vmatprep.subr.mxu0 0.0
        %712 = vmatpush1.msra.mxu0 0.0
        %713 = vmatprep.subr.mxu0 0.0
        %714 = vmatpush1.msra.mxu0 0.0
        %715 = vmatprep.subr.mxu0 0.0
        %716 = vmatpush1.msra.mxu0 0.0
        %717 = vmatprep.mubr.f32.mxu0 0.0
        %718 = vmatmul.mubr.f32.gmra.mrb[0].mxu0 %v648
        %v719 = vpop.f32.mrb[0].mxu0
        %v720 = vadd.f32 0.0, %v719
        %v721 = vpop.f32.mrb[0].mxu0
        %722 = vmatprep.mubr.f32.mxu0 0.0
        %723 = vmatmul.mubr.f32.gmra.mrb[0].mxu0 %v651
        %v724 = vpop.f32.mrb[0].mxu0
        %v725 = vadd.f32 0.0, %v724
        %v726 = vpop.f32.mrb[0].mxu0
        %727 = vdwg.mxu0
        %728 = vrot.lane.b32.xlu0 %v521, 112
        %v729 = vpop.permute.xlu0 %728
        %730 = vrot.lane.b32.xlu0 %v527, 112
        %v731 = vpop.permute.xlu0 %730
        %732 = vrot.lane.b32.xlu0 %v521, 48
        %v733 = vpop.permute.xlu0 %732
        %734 = vrot.lane.b32.xlu0 %v527, 48
        %v735 = vpop.permute.xlu0 %734
        %v736 = vsel %vm537, %v729, 0
        %v738 = vsel %vm537, %v731, 0
        %v740 = vsel %vm537, %v733, 0
        %v742 = vsel %vm537, %v735, 0
        %744 = vmatprep.subr.mxu0 0.0
        %745 = vmatpush1.xpose.msra.mxu0 %v740
        %746 = vmatprep.subr.mxu0 0.0
        %747 = vmatpush1.xpose.msra.mxu0 %v742
        %748 = vmatprep.subr.mxu0 0.0
        %749 = vmatpush1.xpose.msra.mxu0 0.0
        %750 = vmatprep.subr.mxu0 0.0
        %751 = vmatpush1.xpose.msra.mxu0 0.0
        %752 = vmatprep.subr.mxu0 0.0
        %753 = vmatpush1.xpose.msra.mxu0 0.0
        %754 = vmatprep.subr.mxu0 0.0
        %755 = vmatpush1.xpose.msra.mxu0 0.0
        %756 = vmatprep.subr.mxu0 0.0
        %757 = vmatpush1.xpose.msra.mxu0 0.0
        %758 = vmatprep.subr.mxu0 0.0
        %759 = vmatpush1.xpose.msra.mxu0 0.0
        %760 = vmatprep.subr.mxu0 0.0
        %761 = vmatpush1.xpose.msra.mxu0 0.0
        %762 = vmatprep.subr.mxu0 0.0
        %763 = vmatpush1.xpose.msra.mxu0 0.0
        %764 = vmatprep.subr.mxu0 0.0
        %765 = vmatpush1.xpose.msra.mxu0 0.0
        %766 = vmatprep.subr.mxu0 0.0
        %767 = vmatpush1.xpose.msra.mxu0 0.0
        %768 = vmatprep.subr.mxu0 0.0
        %769 = vmatpush1.xpose.msra.mxu0 0.0
        %770 = vmatprep.subr.mxu0 0.0
        %771 = vmatpush1.xpose.msra.mxu0 0.0
        %772 = vmatprep.subr.mxu0 0.0
        %773 = vmatpush1.xpose.msra.mxu0 0.0
        %774 = vmatprep.subr.mxu0 0.0
        %775 = vmatpush1.xpose.msra.mxu0 0.0
        %776 = vmatprep.subr.mxu0 0.0
        %777 = vmatpush1.xpose.msra.mxu0 0.0
        %778 = vmatprep.subr.mxu0 0.0
        %779 = vmatpush1.xpose.msra.mxu0 0.0
        %780 = vmatprep.subr.mxu0 0.0
        %781 = vmatpush1.xpose.msra.mxu0 0.0
        %782 = vmatprep.subr.mxu0 0.0
        %783 = vmatpush1.xpose.msra.mxu0 0.0
        %784 = vmatprep.subr.mxu0 0.0
        %785 = vmatpush1.xpose.msra.mxu0 0.0
        %786 = vmatprep.subr.mxu0 0.0
        %787 = vmatpush1.xpose.msra.mxu0 0.0
        %788 = vmatprep.subr.mxu0 0.0
        %789 = vmatpush1.xpose.msra.mxu0 0.0
        %790 = vmatprep.subr.mxu0 0.0
        %791 = vmatpush1.xpose.msra.mxu0 0.0
        %792 = vmatprep.subr.mxu0 0.0
        %793 = vmatpush1.xpose.msra.mxu0 0.0
        %794 = vmatprep.subr.mxu0 0.0
        %795 = vmatpush1.xpose.msra.mxu0 0.0
        %796 = vmatprep.subr.mxu0 0.0
        %797 = vmatpush1.xpose.msra.mxu0 0.0
        %798 = vmatprep.subr.mxu0 0.0
        %799 = vmatpush1.xpose.msra.mxu0 0.0
        %800 = vmatprep.subr.mxu0 0.0
        %801 = vmatpush1.xpose.msra.mxu0 0.0
        %802 = vmatprep.subr.mxu0 0.0
        %803 = vmatpush1.xpose.msra.mxu0 0.0
        %804 = vmatprep.subr.mxu0 0.0
        %805 = vmatpush1.xpose.msra.mxu0 0.0
        %806 = vmatprep.subr.mxu0 0.0
        %807 = vmatpush1.xpose.msra.mxu0 0.0
        %808 = vmatprep.mubr.f32.mxu0 0.0
        %809 = vmatmul.mubr.f32.gmra.mrb[0].mxu0 %v736
        %v810 = vpop.f32.mrb[0].mxu0
        %v811 = vadd.f32 0.0, %v810
        %v812 = vpop.f32.mrb[0].mxu0
        %813 = vmatprep.mubr.f32.mxu0 0.0
        %814 = vmatmul.mubr.f32.gmra.mrb[0].mxu0 %v738
        %v815 = vpop.f32.mrb[0].mxu0
        %v816 = vadd.f32 0.0, %v815
        %v817 = vpop.f32.mrb[0].mxu0
        %818 = vdwg.mxu0
        %v819 = vmul.f32 %v811, 0.25
        %v820 = vmul.f32 %v816, 0.25
        %v821 = vadd.f32 %v819, %v397
        %v822 = vadd.f32 %v820, %v398
        %v823 = vsel %vm537, %v821, -inf
        %824 = vmax.xlane.f32.xlu0 %v823
        %v825 = vpop.xlane.xlu0 %824
        %v826 = vsel %vm537, %v822, -inf
        %827 = vmax.xlane.f32.xlu0 %v826
        %v828 = vpop.xlane.xlu0 %827
        %v829 = vsub.f32 %v821, %v825
        %v830 = vsub.f32 %v822, %v828
        %v831 = vmul.f32 %v829, 1.442695
        %v832 = vpow.pop %v831
        %v833 = vmul.f32 %v830, 1.442695
        %v834 = vpow.pop %v833
        %v835 = vsel %vm537, %v832, 0.0
        %836 = vadd.xlane.f32.xlu0 %v835
        %v837 = vpop.xlane.xlu0 %836
        %v838 = vsel %vm537, %v834, 0.0
        %839 = vadd.xlane.f32.xlu0 %v838
        %v840 = vpop.xlane.xlu0 %839
        %v841 = vrcp.pop %v837
        %v842 = vmul.f32 %v832, %v841
        %v843 = vrcp.pop %v840
        %v844 = vmul.f32 %v834, %v843
        %847 = vrot.lane.b32.xlu0 %v523, 112
        %v848 = vpop.permute.xlu0 %847
        %849 = vrot.lane.b32.xlu0 %v529, 112
        %v850 = vpop.permute.xlu0 %849
        %v854 = vsel %vm537, %v842, 0
        %v857 = vsel %vm537, %v844, 0
        %859 = vmatprep.subr.mxu0 0.0
        %860 = vmatpush1.msra.mxu0 %v848
        %861 = vmatprep.subr.mxu0 0.0
        %862 = vmatpush1.msra.mxu0 %v850
        %863 = vmatprep.subr.mxu0 0.0
        %864 = vmatpush1.msra.mxu0 0.0
        %865 = vmatprep.subr.mxu0 0.0
        %866 = vmatpush1.msra.mxu0 0.0
        %867 = vmatprep.subr.mxu0 0.0
        %868 = vmatpush1.msra.mxu0 0.0
        %869 = vmatprep.subr.mxu0 0.0
        %870 = vmatpush1.msra.mxu0 0.0
        %871 = vmatprep.subr.mxu0 0.0
        %872 = vmatpush1.msra.mxu0 0.0
        %873 = vmatprep.subr.mxu0 0.0
        %874 = vmatpush1.msra.mxu0 0.0
        %875 = vmatprep.subr.mxu0 0.0
        %876 = vmatpush1.msra.mxu0 0.0
        %877 = vmatprep.subr.mxu0 0.0
        %878 = vmatpush1.msra.mxu0 0.0
        %879 = vmatprep.subr.mxu0 0.0
        %880 = vmatpush1.msra.mxu0 0.0
        %881 = vmatprep.subr.mxu0 0.0
        %882 = vmatpush1.msra.mxu0 0.0
        %883 = vmatprep.subr.mxu0 0.0
        %884 = vmatpush1.msra.mxu0 0.0
        %885 = vmatprep.subr.mxu0 0.0
        %886 = vmatpush1.msra.mxu0 0.0
        %887 = vmatprep.subr.mxu0 0.0
        %888 = vmatpush1.msra.mxu0 0.0
        %889 = vmatprep.subr.mxu0 0.0
        %890 = vmatpush1.msra.mxu0 0.0
        %891 = vmatprep.subr.mxu0 0.0
        %892 = vmatpush1.msra.mxu0 0.0
        %893 = vmatprep.subr.mxu0 0.0
        %894 = vmatpush1.msra.mxu0 0.0
        %895 = vmatprep.subr.mxu0 0.0
        %896 = vmatpush1.msra.mxu0 0.0
        %897 = vmatprep.subr.mxu0 0.0
        %898 = vmatpush1.msra.mxu0 0.0
        %899 = vmatprep.subr.mxu0 0.0
        %900 = vmatpush1.msra.mxu0 0.0
        %901 = vmatprep.subr.mxu0 0.0
        %902 = vmatpush1.msra.mxu0 0.0
        %903 = vmatprep.subr.mxu0 0.0
        %904 = vmatpush1.msra.mxu0 0.0
        %905 = vmatprep.subr.mxu0 0.0
        %906 = vmatpush1.msra.mxu0 0.0
        %907 = vmatprep.subr.mxu0 0.0
        %908 = vmatpush1.msra.mxu0 0.0
        %909 = vmatprep.subr.mxu0 0.0
        %910 = vmatpush1.msra.mxu0 0.0
        %911 = vmatprep.subr.mxu0 0.0
        %912 = vmatpush1.msra.mxu0 0.0
        %913 = vmatprep.subr.mxu0 0.0
        %914 = vmatpush1.msra.mxu0 0.0
        %915 = vmatprep.subr.mxu0 0.0
        %916 = vmatpush1.msra.mxu0 0.0
        %917 = vmatprep.subr.mxu0 0.0
        %918 = vmatpush1.msra.mxu0 0.0
        %919 = vmatprep.subr.mxu0 0.0
        %920 = vmatpush1.msra.mxu0 0.0
        %921 = vmatprep.subr.mxu0 0.0
        %922 = vmatpush1.msra.mxu0 0.0
        %923 = vmatprep.mubr.f32.mxu0 0.0
        %924 = vmatmul.mubr.f32.gmra.mrb[0].mxu0 %v854
        %v925 = vpop.f32.mrb[0].mxu0
        %v926 = vadd.f32 0.0, %v925
        %v927 = vpop.f32.mrb[0].mxu0
        %928 = vmatprep.mubr.f32.mxu0 0.0
        %929 = vmatmul.mubr.f32.gmra.mrb[0].mxu0 %v857
        %v930 = vpop.f32.mrb[0].mxu0
        %v931 = vadd.f32 0.0, %v930
        %v932 = vpop.f32.mrb[0].mxu0
        %933 = vdwg.mxu0
        %934 = vrot.lane.b32.xlu0 %v521, 96
        %v935 = vpop.permute.xlu0 %934
        %936 = vrot.lane.b32.xlu0 %v527, 96
        %v937 = vpop.permute.xlu0 %936
        %938 = vrot.lane.b32.xlu0 %v521, 32
        %v939 = vpop.permute.xlu0 %938
        %940 = vrot.lane.b32.xlu0 %v527, 32
        %v941 = vpop.permute.xlu0 %940
        %v942 = vsel %vm537, %v935, 0
        %v944 = vsel %vm537, %v937, 0
        %v946 = vsel %vm537, %v939, 0
        %v948 = vsel %vm537, %v941, 0
        %950 = vmatprep.subr.mxu0 0.0
        %951 = vmatpush1.xpose.msra.mxu0 %v946
        %952 = vmatprep.subr.mxu0 0.0
        %953 = vmatpush1.xpose.msra.mxu0 %v948
        %954 = vmatprep.subr.mxu0 0.0
        %955 = vmatpush1.xpose.msra.mxu0 0.0
        %956 = vmatprep.subr.mxu0 0.0
        %957 = vmatpush1.xpose.msra.mxu0 0.0
        %958 = vmatprep.subr.mxu0 0.0
        %959 = vmatpush1.xpose.msra.mxu0 0.0
        %960 = vmatprep.subr.mxu0 0.0
        %961 = vmatpush1.xpose.msra.mxu0 0.0
        %962 = vmatprep.subr.mxu0 0.0
        %963 = vmatpush1.xpose.msra.mxu0 0.0
        %964 = vmatprep.subr.mxu0 0.0
        %965 = vmatpush1.xpose.msra.mxu0 0.0
        %966 = vmatprep.subr.mxu0 0.0
        %967 = vmatpush1.xpose.msra.mxu0 0.0
        %968 = vmatprep.subr.mxu0 0.0
        %969 = vmatpush1.xpose.msra.mxu0 0.0
        %970 = vmatprep.subr.mxu0 0.0
        %971 = vmatpush1.xpose.msra.mxu0 0.0
        %972 = vmatprep.subr.mxu0 0.0
        %973 = vmatpush1.xpose.msra.mxu0 0.0
        %974 = vmatprep.subr.mxu0 0.0
        %975 = vmatpush1.xpose.msra.mxu0 0.0
        %976 = vmatprep.subr.mxu0 0.0
        %977 = vmatpush1.xpose.msra.mxu0 0.0
        %978 = vmatprep.subr.mxu0 0.0
        %979 = vmatpush1.xpose.msra.mxu0 0.0
        %980 = vmatprep.subr.mxu0 0.0
        %981 = vmatpush1.xpose.msra.mxu0 0.0
        %982 = vmatprep.subr.mxu0 0.0
        %983 = vmatpush1.xpose.msra.mxu0 0.0
        %984 = vmatprep.subr.mxu0 0.0
        %985 = vmatpush1.xpose.msra.mxu0 0.0
        %986 = vmatprep.subr.mxu0 0.0
        %987 = vmatpush1.xpose.msra.mxu0 0.0
        %988 = vmatprep.subr.mxu0 0.0
        %989 = vmatpush1.xpose.msra.mxu0 0.0
        %990 = vmatprep.subr.mxu0 0.0
        %991 = vmatpush1.xpose.msra.mxu0 0.0
        %992 = vmatprep.subr.mxu0 0.0
        %993 = vmatpush1.xpose.msra.mxu0 0.0
        %994 = vmatprep.subr.mxu0 0.0
        %995 = vmatpush1.xpose.msra.mxu0 0.0
        %996 = vmatprep.subr.mxu0 0.0
        %997 = vmatpush1.xpose.msra.mxu0 0.0
        %998 = vmatprep.subr.mxu0 0.0
        %999 = vmatpush1.xpose.msra.mxu0 0.0
        %1000 = vmatprep.subr.mxu0 0.0
        %1001 = vmatpush1.xpose.msra.mxu0 0.0
        %1002 = vmatprep.subr.mxu0 0.0
        %1003 = vmatpush1.xpose.msra.mxu0 0.0
        %1004 = vmatprep.subr.mxu0 0.0
        %1005 = vmatpush1.xpose.msra.mxu0 0.0
        %1006 = vmatprep.subr.mxu0 0.0
        %1007 = vmatpush1.xpose.msra.mxu0 0.0
        %1008 = vmatprep.subr.mxu0 0.0
        %1009 = vmatpush1.xpose.msra.mxu0 0.0
        %1010 = vmatprep.subr.mxu0 0.0
        %1011 = vmatpush1.xpose.msra.mxu0 0.0
        %1012 = vmatprep.subr.mxu0 0.0
        %1013 = vmatpush1.xpose.msra.mxu0 0.0
        %1014 = vmatprep.mubr.f32.mxu0 0.0
        %1015 = vmatmul.mubr.f32.gmra.mrb[0].mxu0 %v942
        %v1016 = vpop.f32.mrb[0].mxu0
        %v1017 = vadd.f32 0.0, %v1016
        %v1018 = vpop.f32.mrb[0].mxu0
        %1019 = vmatprep.mubr.f32.mxu0 0.0
        %1020 = vmatmul.mubr.f32.gmra.mrb[0].mxu0 %v944
        %v1021 = vpop.f32.mrb[0].mxu0
        %v1022 = vadd.f32 0.0, %v1021
        %v1023 = vpop.f32.mrb[0].mxu0
        %1024 = vdwg.mxu0
        %v1025 = vmul.f32 %v1017, 0.25
        %v1026 = vmul.f32 %v1022, 0.25
        %v1027 = vadd.f32 %v1025, %v397
        %v1028 = vadd.f32 %v1026, %v398
        %v1029 = vsel %vm537, %v1027, -inf
        %1030 = vmax.xlane.f32.xlu0 %v1029
        %v1031 = vpop.xlane.xlu0 %1030
        %v1032 = vsel %vm537, %v1028, -inf
        %1033 = vmax.xlane.f32.xlu0 %v1032
        %v1034 = vpop.xlane.xlu0 %1033
        %v1035 = vsub.f32 %v1027, %v1031
        %v1036 = vsub.f32 %v1028, %v1034
        %v1037 = vmul.f32 %v1035, 1.442695
        %v1038 = vpow.pop %v1037
        %v1039 = vmul.f32 %v1036, 1.442695
        %v1040 = vpow.pop %v1039
        %v1041 = vsel %vm537, %v1038, 0.0
        %1042 = vadd.xlane.f32.xlu0 %v1041
        %v1043 = vpop.xlane.xlu0 %1042
        %v1044 = vsel %vm537, %v1040, 0.0
        %1045 = vadd.xlane.f32.xlu0 %v1044
        %v1046 = vpop.xlane.xlu0 %1045
        %v1047 = vrcp.pop %v1043
        %v1048 = vmul.f32 %v1038, %v1047
        %v1049 = vrcp.pop %v1046
        %v1050 = vmul.f32 %v1040, %v1049
        %1051 = vrot.lane.b32.xlu0 %v523, 96
        %v1052 = vpop.permute.xlu0 %1051
        %1053 = vrot.lane.b32.xlu0 %v529, 96
        %v1054 = vpop.permute.xlu0 %1053
        %v1058 = vsel %vm537, %v1048, 0
        %v1061 = vsel %vm537, %v1050, 0
        %1063 = vmatprep.subr.mxu0 0.0
        %1064 = vmatpush1.msra.mxu0 %v1052
        %1065 = vmatprep.subr.mxu0 0.0
        %1066 = vmatpush1.msra.mxu0 %v1054
        %1067 = vmatprep.subr.mxu0 0.0
        %1068 = vmatpush1.msra.mxu0 0.0
        %1069 = vmatprep.subr.mxu0 0.0
        %1070 = vmatpush1.msra.mxu0 0.0
        %1071 = vmatprep.subr.mxu0 0.0
        %1072 = vmatpush1.msra.mxu0 0.0
        %1073 = vmatprep.subr.mxu0 0.0
        %1074 = vmatpush1.msra.mxu0 0.0
        %1075 = vmatprep.subr.mxu0 0.0
        %1076 = vmatpush1.msra.mxu0 0.0
        %1077 = vmatprep.subr.mxu0 0.0
        %1078 = vmatpush1.msra.mxu0 0.0
        %1079 = vmatprep.subr.mxu0 0.0
        %1080 = vmatpush1.msra.mxu0 0.0
        %1081 = vmatprep.subr.mxu0 0.0
        %1082 = vmatpush1.msra.mxu0 0.0
        %1083 = vmatprep.subr.mxu0 0.0
        %1084 = vmatpush1.msra.mxu0 0.0
        %1085 = vmatprep.subr.mxu0 0.0
        %1086 = vmatpush1.msra.mxu0 0.0
        %1087 = vmatprep.subr.mxu0 0.0
        %1088 = vmatpush1.msra.mxu0 0.0
        %1089 = vmatprep.subr.mxu0 0.0
        %1090 = vmatpush1.msra.mxu0 0.0
        %1091 = vmatprep.subr.mxu0 0.0
        %1092 = vmatpush1.msra.mxu0 0.0
        %1093 = vmatprep.subr.mxu0 0.0
        %1094 = vmatpush1.msra.mxu0 0.0
        %1095 = vmatprep.subr.mxu0 0.0
        %1096 = vmatpush1.msra.mxu0 0.0
        %1097 = vmatprep.subr.mxu0 0.0
        %1098 = vmatpush1.msra.mxu0 0.0
        %1099 = vmatprep.subr.mxu0 0.0
        %1100 = vmatpush1.msra.mxu0 0.0
        %1101 = vmatprep.subr.mxu0 0.0
        %1102 = vmatpush1.msra.mxu0 0.0
        %1103 = vmatprep.subr.mxu0 0.0
        %1104 = vmatpush1.msra.mxu0 0.0
        %1105 = vmatprep.subr.mxu0 0.0
        %1106 = vmatpush1.msra.mxu0 0.0
        %1107 = vmatprep.subr.mxu0 0.0
        %1108 = vmatpush1.msra.mxu0 0.0
        %1109 = vmatprep.subr.mxu0 0.0
        %1110 = vmatpush1.msra.mxu0 0.0
        %1111 = vmatprep.subr.mxu0 0.0
        %1112 = vmatpush1.msra.mxu0 0.0
        %1113 = vmatprep.subr.mxu0 0.0
        %1114 = vmatpush1.msra.mxu0 0.0
        %1115 = vmatprep.subr.mxu0 0.0
        %1116 = vmatpush1.msra.mxu0 0.0
        %1117 = vmatprep.subr.mxu0 0.0
        %1118 = vmatpush1.msra.mxu0 0.0
        %1119 = vmatprep.subr.mxu0 0.0
        %1120 = vmatpush1.msra.mxu0 0.0
        %1121 = vmatprep.subr.mxu0 0.0
        %1122 = vmatpush1.msra.mxu0 0.0
        %1123 = vmatprep.subr.mxu0 0.0
        %1124 = vmatpush1.msra.mxu0 0.0
        %1125 = vmatprep.subr.mxu0 0.0
        %1126 = vmatpush1.msra.mxu0 0.0
        %1127 = vmatprep.mubr.f32.mxu0 0.0
        %1128 = vmatmul.mubr.f32.gmra.mrb[0].mxu0 %v1058
        %v1129 = vpop.f32.mrb[0].mxu0
        %v1130 = vadd.f32 0.0, %v1129
        %v1131 = vpop.f32.mrb[0].mxu0
        %1132 = vmatprep.mubr.f32.mxu0 0.0
        %1133 = vmatmul.mubr.f32.gmra.mrb[0].mxu0 %v1061
        %v1134 = vpop.f32.mrb[0].mxu0
        %v1135 = vadd.f32 0.0, %v1134
        %v1136 = vpop.f32.mrb[0].mxu0
        %1137 = vdwg.mxu0
        %1138 = vrot.lane.b32.xlu0 %v521, 80
        %v1139 = vpop.permute.xlu0 %1138
        %1140 = vrot.lane.b32.xlu0 %v527, 80
        %v1141 = vpop.permute.xlu0 %1140
        %1142 = vrot.lane.b32.xlu0 %v521, 16
        %v1143 = vpop.permute.xlu0 %1142
        %1144 = vrot.lane.b32.xlu0 %v527, 16
        %v1145 = vpop.permute.xlu0 %1144
        %v1146 = vsel %vm537, %v1139, 0
        %v1148 = vsel %vm537, %v1141, 0
        %v1150 = vsel %vm537, %v1143, 0
        %v1152 = vsel %vm537, %v1145, 0
        %1154 = vmatprep.subr.mxu0 0.0
        %1155 = vmatpush1.xpose.msra.mxu0 %v1150
        %1156 = vmatprep.subr.mxu0 0.0
        %1157 = vmatpush1.xpose.msra.mxu0 %v1152
        %1158 = vmatprep.subr.mxu0 0.0
        %1159 = vmatpush1.xpose.msra.mxu0 0.0
        %1160 = vmatprep.subr.mxu0 0.0
        %1161 = vmatpush1.xpose.msra.mxu0 0.0
        %1162 = vmatprep.subr.mxu0 0.0
        %1163 = vmatpush1.xpose.msra.mxu0 0.0
        %1164 = vmatprep.subr.mxu0 0.0
        %1165 = vmatpush1.xpose.msra.mxu0 0.0
        %1166 = vmatprep.subr.mxu0 0.0
        %1167 = vmatpush1.xpose.msra.mxu0 0.0
        %1168 = vmatprep.subr.mxu0 0.0
        %1169 = vmatpush1.xpose.msra.mxu0 0.0
        %1170 = vmatprep.subr.mxu0 0.0
        %1171 = vmatpush1.xpose.msra.mxu0 0.0
        %1172 = vmatprep.subr.mxu0 0.0
        %1173 = vmatpush1.xpose.msra.mxu0 0.0
        %1174 = vmatprep.subr.mxu0 0.0
        %1175 = vmatpush1.xpose.msra.mxu0 0.0
        %1176 = vmatprep.subr.mxu0 0.0
        %1177 = vmatpush1.xpose.msra.mxu0 0.0
        %1178 = vmatprep.subr.mxu0 0.0
        %1179 = vmatpush1.xpose.msra.mxu0 0.0
        %1180 = vmatprep.subr.mxu0 0.0
        %1181 = vmatpush1.xpose.msra.mxu0 0.0
        %1182 = vmatprep.subr.mxu0 0.0
        %1183 = vmatpush1.xpose.msra.mxu0 0.0
        %1184 = vmatprep.subr.mxu0 0.0
        %1185 = vmatpush1.xpose.msra.mxu0 0.0
        %1186 = vmatprep.subr.mxu0 0.0
        %1187 = vmatpush1.xpose.msra.mxu0 0.0
        %1188 = vmatprep.subr.mxu0 0.0
        %1189 = vmatpush1.xpose.msra.mxu0 0.0
        %1190 = vmatprep.subr.mxu0 0.0
        %1191 = vmatpush1.xpose.msra.mxu0 0.0
        %1192 = vmatprep.subr.mxu0 0.0
        %1193 = vmatpush1.xpose.msra.mxu0 0.0
        %1194 = vmatprep.subr.mxu0 0.0
        %1195 = vmatpush1.xpose.msra.mxu0 0.0
        %1196 = vmatprep.subr.mxu0 0.0
        %1197 = vmatpush1.xpose.msra.mxu0 0.0
        %1198 = vmatprep.subr.mxu0 0.0
        %1199 = vmatpush1.xpose.msra.mxu0 0.0
        %1200 = vmatprep.subr.mxu0 0.0
        %1201 = vmatpush1.xpose.msra.mxu0 0.0
        %1202 = vmatprep.subr.mxu0 0.0
        %1203 = vmatpush1.xpose.msra.mxu0 0.0
        %1204 = vmatprep.subr.mxu0 0.0
        %1205 = vmatpush1.xpose.msra.mxu0 0.0
        %1206 = vmatprep.subr.mxu0 0.0
        %1207 = vmatpush1.xpose.msra.mxu0 0.0
        %1208 = vmatprep.subr.mxu0 0.0
        %1209 = vmatpush1.xpose.msra.mxu0 0.0
        %1210 = vmatprep.subr.mxu0 0.0
        %1211 = vmatpush1.xpose.msra.mxu0 0.0
        %1212 = vmatprep.subr.mxu0 0.0
        %1213 = vmatpush1.xpose.msra.mxu0 0.0
        %1214 = vmatprep.subr.mxu0 0.0
        %1215 = vmatpush1.xpose.msra.mxu0 0.0
        %1216 = vmatprep.subr.mxu0 0.0
        %1217 = vmatpush1.xpose.msra.mxu0 0.0
        %1218 = vmatprep.mubr.f32.mxu0 0.0
        %1219 = vmatmul.mubr.f32.gmra.mrb[0].mxu0 %v1146
        %v1220 = vpop.f32.mrb[0].mxu0
        %v1221 = vadd.f32 0.0, %v1220
        %v1222 = vpop.f32.mrb[0].mxu0
        %1223 = vmatprep.mubr.f32.mxu0 0.0
        %1224 = vmatmul.mubr.f32.gmra.mrb[0].mxu0 %v1148
        %v1225 = vpop.f32.mrb[0].mxu0
        %v1226 = vadd.f32 0.0, %v1225
        %v1227 = vpop.f32.mrb[0].mxu0
        %1228 = vdwg.mxu0
        %v1229 = vmul.f32 %v1221, 0.25
        %v1230 = vmul.f32 %v1226, 0.25
        %v1231 = vadd.f32 %v1229, %v397
        %v1232 = vadd.f32 %v1230, %v398
        %v1233 = vsel %vm537, %v1231, -inf
        %1234 = vmax.xlane.f32.xlu0 %v1233
        %v1235 = vpop.xlane.xlu0 %1234
        %v1236 = vsel %vm537, %v1232, -inf
        %1237 = vmax.xlane.f32.xlu0 %v1236
        %v1238 = vpop.xlane.xlu0 %1237
        %v1239 = vsub.f32 %v1231, %v1235
        %v1240 = vsub.f32 %v1232, %v1238
        %v1241 = vmul.f32 %v1239, 1.442695
        %v1242 = vpow.pop %v1241
        %v1243 = vmul.f32 %v1240, 1.442695
        %v1244 = vpow.pop %v1243
        %v1245 = vsel %vm537, %v1242, 0.0
        %1246 = vadd.xlane.f32.xlu0 %v1245
        %v1247 = vpop.xlane.xlu0 %1246
        %v1248 = vsel %vm537, %v1244, 0.0
        %1249 = vadd.xlane.f32.xlu0 %v1248
        %v1250 = vpop.xlane.xlu0 %1249
        %v1251 = vrcp.pop %v1247
        %v1252 = vmul.f32 %v1242, %v1251
        %v1253 = vrcp.pop %v1250
        %v1254 = vmul.f32 %v1244, %v1253
        %1255 = vrot.lane.b32.xlu0 %v523, 80
        %v1256 = vpop.permute.xlu0 %1255
        %1257 = vrot.lane.b32.xlu0 %v529, 80
        %v1258 = vpop.permute.xlu0 %1257
        %v1262 = vsel %vm537, %v1252, 0
        %v1265 = vsel %vm537, %v1254, 0
        %1267 = vmatprep.subr.mxu0 0.0
        %1268 = vmatpush1.msra.mxu0 %v1256
        %1269 = vmatprep.subr.mxu0 0.0
        %1270 = vmatpush1.msra.mxu0 %v1258
        %1271 = vmatprep.subr.mxu0 0.0
        %1272 = vmatpush1.msra.mxu0 0.0
        %1273 = vmatprep.subr.mxu0 0.0
        %1274 = vmatpush1.msra.mxu0 0.0
        %1275 = vmatprep.subr.mxu0 0.0
        %1276 = vmatpush1.msra.mxu0 0.0
        %1277 = vmatprep.subr.mxu0 0.0
        %1278 = vmatpush1.msra.mxu0 0.0
        %1279 = vmatprep.subr.mxu0 0.0
        %1280 = vmatpush1.msra.mxu0 0.0
        %1281 = vmatprep.subr.mxu0 0.0
        %1282 = vmatpush1.msra.mxu0 0.0
        %1283 = vmatprep.subr.mxu0 0.0
        %1284 = vmatpush1.msra.mxu0 0.0
        %1285 = vmatprep.subr.mxu0 0.0
        %1286 = vmatpush1.msra.mxu0 0.0
        %1287 = vmatprep.subr.mxu0 0.0
        %1288 = vmatpush1.msra.mxu0 0.0
        %1289 = vmatprep.subr.mxu0 0.0
        %1290 = vmatpush1.msra.mxu0 0.0
        %1291 = vmatprep.subr.mxu0 0.0
        %1292 = vmatpush1.msra.mxu0 0.0
        %1293 = vmatprep.subr.mxu0 0.0
        %1294 = vmatpush1.msra.mxu0 0.0
        %1295 = vmatprep.subr.mxu0 0.0
        %1296 = vmatpush1.msra.mxu0 0.0
        %1297 = vmatprep.subr.mxu0 0.0
        %1298 = vmatpush1.msra.mxu0 0.0
        %1299 = vmatprep.subr.mxu0 0.0
        %1300 = vmatpush1.msra.mxu0 0.0
        %1301 = vmatprep.subr.mxu0 0.0
        %1302 = vmatpush1.msra.mxu0 0.0
        %1303 = vmatprep.subr.mxu0 0.0
        %1304 = vmatpush1.msra.mxu0 0.0
        %1305 = vmatprep.subr.mxu0 0.0
        %1306 = vmatpush1.msra.mxu0 0.0
        %1307 = vmatprep.subr.mxu0 0.0
        %1308 = vmatpush1.msra.mxu0 0.0
        %1309 = vmatprep.subr.mxu0 0.0
        %1310 = vmatpush1.msra.mxu0 0.0
        %1311 = vmatprep.subr.mxu0 0.0
        %1312 = vmatpush1.msra.mxu0 0.0
        %1313 = vmatprep.subr.mxu0 0.0
        %1314 = vmatpush1.msra.mxu0 0.0
        %1315 = vmatprep.subr.mxu0 0.0
        %1316 = vmatpush1.msra.mxu0 0.0
        %1317 = vmatprep.subr.mxu0 0.0
        %1318 = vmatpush1.msra.mxu0 0.0
        %1319 = vmatprep.subr.mxu0 0.0
        %1320 = vmatpush1.msra.mxu0 0.0
        %1321 = vmatprep.subr.mxu0 0.0
        %1322 = vmatpush1.msra.mxu0 0.0
        %1323 = vmatprep.subr.mxu0 0.0
        %1324 = vmatpush1.msra.mxu0 0.0
        %1325 = vmatprep.subr.mxu0 0.0
        %1326 = vmatpush1.msra.mxu0 0.0
        %1327 = vmatprep.subr.mxu0 0.0
        %1328 = vmatpush1.msra.mxu0 0.0
        %1329 = vmatprep.subr.mxu0 0.0
        %1330 = vmatpush1.msra.mxu0 0.0
        %1331 = vmatprep.mubr.f32.mxu0 0.0
        %1332 = vmatmul.mubr.f32.gmra.mrb[0].mxu0 %v1262
        %v1333 = vpop.f32.mrb[0].mxu0
        %v1334 = vadd.f32 0.0, %v1333
        %v1335 = vpop.f32.mrb[0].mxu0
        %1336 = vmatprep.mubr.f32.mxu0 0.0
        %1337 = vmatmul.mubr.f32.gmra.mrb[0].mxu0 %v1265
        %v1338 = vpop.f32.mrb[0].mxu0
        %v1339 = vadd.f32 0.0, %v1338
        %v1340 = vpop.f32.mrb[0].mxu0
        %1341 = vdwg.mxu0
        %1344 = vrot.lane.b32.xlu0 %v926, 16
        %v1345 = vpop.permute.xlu0 %1344
        %1346 = vrot.lane.b32.xlu0 %v931, 16
        %v1347 = vpop.permute.xlu0 %1346
        %1352 = vrot.lane.b32.xlu0 %v1130, 32
        %v1353 = vpop.permute.xlu0 %1352
        %1354 = vrot.lane.b32.xlu0 %v1135, 32
        %v1355 = vpop.permute.xlu0 %1354
        %1360 = vrot.lane.b32.xlu0 %v1334, 48
        %v1361 = vpop.permute.xlu0 %1360
        %1362 = vrot.lane.b32.xlu0 %v1339, 48
        %v1363 = vpop.permute.xlu0 %1362
        %v1366 = vsel %vm537, %v720, %v1345
        %v1367 = vsel %vm537, %v725, %v1347
        %v1368 = vsel %vm400, %v1366, %v1353
        %v1369 = vsel %vm400, %v1367, %v1355
        %vm1370 = vcmask 392192
        %v1371 = vsel %vm1370, %v1368, %v1361
        %v1372 = vsel %vm1370, %v1369, %v1363
        %v1373 = vld [vmem:[%s367] sm:$0xff]
        %v1374 = vld [vmem:[%s367 + $0x8] sm:$0xff]
        %v1375 = vld [vmem:[%s367 + $0x10] sm:$0xff]
        %v1376 = vld [vmem:[%s367 + $0x18] sm:$0xff]
        %v1377 = vld [vmem:[%s367 + $0x20] sm:$0xff]
        %v1378 = vld [vmem:[%s367 + $0x28] sm:$0xff]
        %v1379 = vld [vmem:[%s367 + $0x30] sm:$0xff]
        %v1380 = vld [vmem:[%s367 + $0x38] sm:$0xff]
        %vm1381 = vcmask 523264
        %v1383 = vsel %vm1381, %v1371, 0
        %v1386 = vsel %vm1381, %v1372, 0
        %1388 = vmatprep.subr.mxu0 0.0
        %1389 = vmatpush1.msra.mxu0 %v1373
        %1390 = vmatprep.subr.mxu0 0.0
        %1391 = vmatpush1.msra.mxu0 %v1374
        %1392 = vmatprep.subr.mxu0 0.0
        %1393 = vmatpush1.msra.mxu0 %v1375
        %1394 = vmatprep.subr.mxu0 0.0
        %1395 = vmatpush1.msra.mxu0 %v1376
        %1396 = vmatprep.subr.mxu0 0.0
        %1397 = vmatpush1.msra.mxu0 %v1377
        %1398 = vmatprep.subr.mxu0 0.0
        %1399 = vmatpush1.msra.mxu0 %v1378
        %1400 = vmatprep.subr.mxu0 0.0
        %1401 = vmatpush1.msra.mxu0 %v1379
        %1402 = vmatprep.subr.mxu0 0.0
        %1403 = vmatpush1.msra.mxu0 %v1380
        %1404 = vmatprep.subr.mxu0 0.0
        %1405 = vmatpush1.msra.mxu0 0.0
        %1406 = vmatprep.subr.mxu0 0.0
        %1407 = vmatpush1.msra.mxu0 0.0
        %1408 = vmatprep.subr.mxu0 0.0
        %1409 = vmatpush1.msra.mxu0 0.0
        %1410 = vmatprep.subr.mxu0 0.0
        %1411 = vmatpush1.msra.mxu0 0.0
        %1412 = vmatprep.subr.mxu0 0.0
        %1413 = vmatpush1.msra.mxu0 0.0
        %1414 = vmatprep.subr.mxu0 0.0
        %1415 = vmatpush1.msra.mxu0 0.0
        %1416 = vmatprep.subr.mxu0 0.0
        %1417 = vmatpush1.msra.mxu0 0.0
        %1418 = vmatprep.subr.mxu0 0.0
        %1419 = vmatpush1.msra.mxu0 0.0
        %1420 = vmatprep.subr.mxu0 0.0
        %1421 = vmatpush1.msra.mxu0 0.0
        %1422 = vmatprep.subr.mxu0 0.0
        %1423 = vmatpush1.msra.mxu0 0.0
        %1424 = vmatprep.subr.mxu0 0.0
        %1425 = vmatpush1.msra.mxu0 0.0
        %1426 = vmatprep.subr.mxu0 0.0
        %1427 = vmatpush1.msra.mxu0 0.0
        %1428 = vmatprep.subr.mxu0 0.0
        %1429 = vmatpush1.msra.mxu0 0.0
        %1430 = vmatprep.subr.mxu0 0.0
        %1431 = vmatpush1.msra.mxu0 0.0
        %1432 = vmatprep.subr.mxu0 0.0
        %1433 = vmatpush1.msra.mxu0 0.0
        %1434 = vmatprep.subr.mxu0 0.0
        %1435 = vmatpush1.msra.mxu0 0.0
        %1436 = vmatprep.subr.mxu0 0.0
        %1437 = vmatpush1.msra.mxu0 0.0
        %1438 = vmatprep.subr.mxu0 0.0
        %1439 = vmatpush1.msra.mxu0 0.0
        %1440 = vmatprep.subr.mxu0 0.0
        %1441 = vmatpush1.msra.mxu0 0.0
        %1442 = vmatprep.subr.mxu0 0.0
        %1443 = vmatpush1.msra.mxu0 0.0
        %1444 = vmatprep.subr.mxu0 0.0
        %1445 = vmatpush1.msra.mxu0 0.0
        %1446 = vmatprep.subr.mxu0 0.0
        %1447 = vmatpush1.msra.mxu0 0.0
        %1448 = vmatprep.subr.mxu0 0.0
        %1449 = vmatpush1.msra.mxu0 0.0
        %1450 = vmatprep.subr.mxu0 0.0
        %1451 = vmatpush1.msra.mxu0 0.0
        %1452 = vmatprep.mubr.f32.mxu0 0.0
        %1453 = vmatmul.mubr.f32.gmra.mrb[0].mxu0 %v1383
        %v1454 = vpop.f32.mrb[0].mxu0
        %v1455 = vadd.f32 0.0, %v1454
        %v1456 = vpop.f32.mrb[0].mxu0
        %1457 = vmatprep.mubr.f32.mxu0 0.0
        %1458 = vmatmul.mubr.f32.gmra.mrb[0].mxu0 %v1386
        %v1459 = vpop.f32.mrb[0].mxu0
        %v1460 = vadd.f32 0.0, %v1459
        %v1461 = vpop.f32.mrb[0].mxu0
        %1462 = vdwg.mxu0
        %v1463 = vadd.f32 %v395, %v1455
        %v1464 = vadd.f32 %v396, %v1460
        %v1465 = vlaneseq
        %v1466 = vshrl.u32 %v1465, 7
        %v1467 = vsub.s32 2, %v1466
        %v1468 = vrot.slane %v399, %v1467
        %v1469 = vadd.f32 %v1463, %v1468
        %v1470 = vadd.f32 %v1464, %v1468
        %v1471 = vsel %vm400, %v1469, 0.0
        %1472 = vadd.xlane.f32.xlu0 %v1471
        %v1473 = vpop.xlane.xlu0 %1472
        %v1474 = vsel %vm400, %v1470, 0.0
        %1475 = vadd.xlane.f32.xlu0 %v1474
        %v1476 = vpop.xlane.xlu0 %1475
        %v1477 = vmul.f32 %v1473, %v407
        %v1478 = vmul.f32 %v1476, %v407
        %v1479 = vsub.f32 %v1469, %v1477
        %v1480 = vsub.f32 %v1470, %v1478
        %v1481 = vmul.f32 %v1479, %v1479
        %v1482 = vmul.f32 %v1480, %v1480
        %v1483 = vsel %vm400, %v1481, 0.0
        %1484 = vadd.xlane.f32.xlu0 %v1483
        %v1485 = vpop.xlane.xlu0 %1484
        %v1486 = vsel %vm400, %v1482, 0.0
        %1487 = vadd.xlane.f32.xlu0 %v1486
        %v1488 = vpop.xlane.xlu0 %1487
        %v1489 = vmul.f32 %v1485, %v407
        %v1490 = vmul.f32 %v1488, %v407
        %v1491 = vadd.f32 %v1489, 1e-05
        %v1492 = vadd.f32 %v1490, 1e-05
        %v1493 = vrsqrt.pop %v1491
        %v1494 = vrsqrt.pop %v1492
        %v1495 = vmul.f32 %v1479, %v1493
        %v1496 = vmul.f32 %v1480, %v1494
        %v1497 = vlaneseq
        %v1498 = vshrl.u32 %v1497, 7
        %v1499 = vsub.s32 3, %v1498
        %v1500 = vrot.slane %v399, %v1499
        %v1501 = vmul.f32 %v1495, %v1500
        %v1502 = vmul.f32 %v1496, %v1500
        %v1503 = vlaneseq
        %v1504 = vshrl.u32 %v1503, 7
        %v1505 = vsub.s32 4, %v1504
        %v1506 = vrot.slane %v399, %v1505
        %v1507 = vadd.f32 %v1501, %v1506
        %v1508 = vadd.f32 %v1502, %v1506
        %v1509 = vld [vmem:[%s376] sm:$0xff]
        %v1510 = vld [vmem:[%s376 + $0x8] sm:$0xff]
        %v1511 = vld [vmem:[%s376 + $0x10] sm:$0xff]
        %v1512 = vld [vmem:[%s376 + $0x18] sm:$0xff]
        %v1513 = vld [vmem:[%s376 + $0x20] sm:$0xff]
        %v1514 = vld [vmem:[%s376 + $0x28] sm:$0xff]
        %v1515 = vld [vmem:[%s376 + $0x30] sm:$0xff]
        %v1516 = vld [vmem:[%s376 + $0x38] sm:$0xff]
        %v1517 = vld [vmem:[%s380] sm:$0x3]
        %v1519 = vlaneseq
        %v1520 = vshrl.u32 %v1519, 7
        %v1521 = vsub.s32 0, %v1520
        %v1522 = vrot.slane %v1517, %v1521
        %v1523 = vlaneseq
        %v1524 = vshrl.u32 %v1523, 7
        %v1525 = vsub.s32 1, %v1524
        %v1526 = vrot.slane %v1517, %v1525
        %v1530 = vsel %vm400, %v1507, 0
        %v1533 = vsel %vm400, %v1508, 0
        %1535 = vmatprep.subr.mxu0 %v1510
        %1536 = vmatpush1.msra.mxu0 %v1509
        %1537 = vmatprep.subr.mxu0 %v1512
        %1538 = vmatpush1.msra.mxu0 %v1511
        %1539 = vmatprep.subr.mxu0 %v1514
        %1540 = vmatpush1.msra.mxu0 %v1513
        %1541 = vmatprep.subr.mxu0 %v1516
        %1542 = vmatpush1.msra.mxu0 %v1515
        %1543 = vmatprep.subr.mxu0 0.0
        %1544 = vmatpush1.msra.mxu0 0.0
        %1545 = vmatprep.subr.mxu0 0.0
        %1546 = vmatpush1.msra.mxu0 0.0
        %1547 = vmatprep.subr.mxu0 0.0
        %1548 = vmatpush1.msra.mxu0 0.0
        %1549 = vmatprep.subr.mxu0 0.0
        %1550 = vmatpush1.msra.mxu0 0.0
        %1551 = vmatprep.subr.mxu0 0.0
        %1552 = vmatpush1.msra.mxu0 0.0
        %1553 = vmatprep.subr.mxu0 0.0
        %1554 = vmatpush1.msra.mxu0 0.0
        %1555 = vmatprep.subr.mxu0 0.0
        %1556 = vmatpush1.msra.mxu0 0.0
        %1557 = vmatprep.subr.mxu0 0.0
        %1558 = vmatpush1.msra.mxu0 0.0
        %1559 = vmatprep.subr.mxu0 0.0
        %1560 = vmatpush1.msra.mxu0 0.0
        %1561 = vmatprep.subr.mxu0 0.0
        %1562 = vmatpush1.msra.mxu0 0.0
        %1563 = vmatprep.subr.mxu0 0.0
        %1564 = vmatpush1.msra.mxu0 0.0
        %1565 = vmatprep.subr.mxu0 0.0
        %1566 = vmatpush1.msra.mxu0 0.0
        %1567 = vmatprep.subr.mxu0 0.0
        %1568 = vmatpush1.msra.mxu0 0.0
        %1569 = vmatprep.subr.mxu0 0.0
        %1570 = vmatpush1.msra.mxu0 0.0
        %1571 = vmatprep.subr.mxu0 0.0
        %1572 = vmatpush1.msra.mxu0 0.0
        %1573 = vmatprep.subr.mxu0 0.0
        %1574 = vmatpush1.msra.mxu0 0.0
        %1575 = vmatprep.subr.mxu0 0.0
        %1576 = vmatpush1.msra.mxu0 0.0
        %1577 = vmatprep.subr.mxu0 0.0
        %1578 = vmatpush1.msra.mxu0 0.0
        %1579 = vmatprep.subr.mxu0 0.0
        %1580 = vmatpush1.msra.mxu0 0.0
        %1581 = vmatprep.subr.mxu0 0.0
        %1582 = vmatpush1.msra.mxu0 0.0
        %1583 = vmatprep.subr.mxu0 0.0
        %1584 = vmatpush1.msra.mxu0 0.0
        %1585 = vmatprep.subr.mxu0 0.0
        %1586 = vmatpush1.msra.mxu0 0.0
        %1587 = vmatprep.subr.mxu0 0.0
        %1588 = vmatpush1.msra.mxu0 0.0
        %1589 = vmatprep.subr.mxu0 0.0
        %1590 = vmatpush1.msra.mxu0 0.0
        %1591 = vmatprep.subr.mxu0 0.0
        %1592 = vmatpush1.msra.mxu0 0.0
        %1593 = vmatprep.subr.mxu0 0.0
        %1594 = vmatpush1.msra.mxu0 0.0
        %1595 = vmatprep.subr.mxu0 0.0
        %1596 = vmatpush1.msra.mxu0 0.0
        %1597 = vmatprep.subr.mxu0 0.0
        %1598 = vmatpush1.msra.mxu0 0.0
        %1599 = vmatprep.mubr.f32.mxu0 0.0
        %1600 = vmatmul.mubr.f32.gmra.mrb[0].mxu0 %v1530
        %v1601 = vpop.f32.mrb[0].mxu0
        %v1602 = vadd.f32 %v1522, %v1601
        %v1603 = vpop.f32.mrb[0].mxu0
        %v1604 = vadd.f32 %v1526, %v1603
        %1605 = vmatprep.mubr.f32.mxu0 0.0
        %1606 = vmatmul.mubr.f32.gmra.mrb[0].mxu0 %v1533
        %v1607 = vpop.f32.mrb[0].mxu0
        %v1608 = vadd.f32 %v1522, %v1607
        %v1609 = vpop.f32.mrb[0].mxu0
        %v1610 = vadd.f32 %v1526, %v1609
        %1611 = vdwg.mxu0
        %v1612 = vmul.f32 %v1604, 0.5
        %v1613 = vmul.f32 %v1610, 0.5
        %v1614 = vmul.f32 %v1604, 0.70710677
        %v1615 = vmul.f32 %v1610, 0.70710677
        %v1616 = verf.f32.pop %v1614
        %v1617 = verf.f32.pop %v1615
        %v1618 = vadd.f32 %v1616, 1.0
        %v1619 = vadd.f32 %v1617, 1.0
        %v1620 = vmul.f32 %v1612, %v1618
        %v1621 = vmul.f32 %v1613, %v1619
        %v1622 = vmul.f32 %v1602, %v1620
        %v1623 = vmul.f32 %v1608, %v1621
        %v1624 = vld [vmem:[%s385] sm:$0xff]
        %v1625 = vld [vmem:[%s385 + $0x8] sm:$0xff]
        %v1626 = vld [vmem:[%s385 + $0x10] sm:$0xff]
        %v1627 = vld [vmem:[%s385 + $0x18] sm:$0xff]
        %v1628 = vld [vmem:[%s385 + $0x20] sm:$0xff]
        %v1629 = vld [vmem:[%s385 + $0x28] sm:$0xff]
        %v1630 = vld [vmem:[%s385 + $0x30] sm:$0xff]
        %v1631 = vld [vmem:[%s385 + $0x38] sm:$0xff]
        %v1632 = vld [vmem:[%s385 + $0x40] sm:$0xff]
        %v1633 = vld [vmem:[%s385 + $0x48] sm:$0xff]
        %v1634 = vld [vmem:[%s385 + $0x50] sm:$0xff]
        %v1635 = vld [vmem:[%s385 + $0x58] sm:$0xff]
        %v1636 = vld [vmem:[%s385 + $0x60] sm:$0xff]
        %v1637 = vld [vmem:[%s385 + $0x68] sm:$0xff]
        %v1638 = vld [vmem:[%s385 + $0x70] sm:$0xff]
        %v1639 = vld [vmem:[%s385 + $0x78] sm:$0xff]
        %v1640 = vlaneseq
        %v1641 = vshrl.u32 %v1640, 7
        %v1642 = vsub.s32 5, %v1641
        %v1643 = vrot.slane %v399, %v1642
        %1644 = vmatprep.subr.mxu0 0.0
        %1645 = vmatpush1.msra.mxu0 %v1624
        %1646 = vmatprep.subr.mxu0 0.0
        %1647 = vmatpush1.msra.mxu0 %v1625
        %1648 = vmatprep.subr.mxu0 0.0
        %1649 = vmatpush1.msra.mxu0 %v1626
        %1650 = vmatprep.subr.mxu0 0.0
        %1651 = vmatpush1.msra.mxu0 %v1627
        %1652 = vmatprep.subr.mxu0 0.0
        %1653 = vmatpush1.msra.mxu0 %v1628
        %1654 = vmatprep.subr.mxu0 0.0
        %1655 = vmatpush1.msra.mxu0 %v1629
        %1656 = vmatprep.subr.mxu0 0.0
        %1657 = vmatpush1.msra.mxu0 %v1630
        %1658 = vmatprep.subr.mxu0 0.0
        %1659 = vmatpush1.msra.mxu0 %v1631
        %1660 = vmatprep.subr.mxu0 0.0
        %1661 = vmatpush1.msra.mxu0 %v1632
        %1662 = vmatprep.subr.mxu0 0.0
        %1663 = vmatpush1.msra.mxu0 %v1633
        %1664 = vmatprep.subr.mxu0 0.0
        %1665 = vmatpush1.msra.mxu0 %v1634
        %1666 = vmatprep.subr.mxu0 0.0
        %1667 = vmatpush1.msra.mxu0 %v1635
        %1668 = vmatprep.subr.mxu0 0.0
        %1669 = vmatpush1.msra.mxu0 %v1636
        %1670 = vmatprep.subr.mxu0 0.0
        %1671 = vmatpush1.msra.mxu0 %v1637
        %1672 = vmatprep.subr.mxu0 0.0
        %1673 = vmatpush1.msra.mxu0 %v1638
        %1674 = vmatprep.subr.mxu0 0.0
        %1675 = vmatpush1.msra.mxu0 %v1639
        %1676 = vmatprep.subr.mxu0 0.0
        %1677 = vmatpush1.msra.mxu0 0.0
        %1678 = vmatprep.subr.mxu0 0.0
        %1679 = vmatpush1.msra.mxu0 0.0
        %1680 = vmatprep.subr.mxu0 0.0
        %1681 = vmatpush1.msra.mxu0 0.0
        %1682 = vmatprep.subr.mxu0 0.0
        %1683 = vmatpush1.msra.mxu0 0.0
        %1684 = vmatprep.subr.mxu0 0.0
        %1685 = vmatpush1.msra.mxu0 0.0
        %1686 = vmatprep.subr.mxu0 0.0
        %1687 = vmatpush1.msra.mxu0 0.0
        %1688 = vmatprep.subr.mxu0 0.0
        %1689 = vmatpush1.msra.mxu0 0.0
        %1690 = vmatprep.subr.mxu0 0.0
        %1691 = vmatpush1.msra.mxu0 0.0
        %1692 = vmatprep.subr.mxu0 0.0
        %1693 = vmatpush1.msra.mxu0 0.0
        %1694 = vmatprep.subr.mxu0 0.0
        %1695 = vmatpush1.msra.mxu0 0.0
        %1696 = vmatprep.subr.mxu0 0.0
        %1697 = vmatpush1.msra.mxu0 0.0
        %1698 = vmatprep.subr.mxu0 0.0
        %1699 = vmatpush1.msra.mxu0 0.0
        %1700 = vmatprep.subr.mxu0 0.0
        %1701 = vmatpush1.msra.mxu0 0.0
        %1702 = vmatprep.subr.mxu0 0.0
        %1703 = vmatpush1.msra.mxu0 0.0
        %1704 = vmatprep.subr.mxu0 0.0
        %1705 = vmatpush1.msra.mxu0 0.0
        %1706 = vmatprep.subr.mxu0 0.0
        %1707 = vmatpush1.msra.mxu0 0.0
        %1708 = vmatprep.mubr.f32.mxu0 0.0
        %1709 = vmatmul.mubr.f32.gmra.mrb[0].mxu0 %v1622
        %v1710 = vpop.f32.mrb[0].mxu0
        %v1711 = vadd.f32 %v1643, %v1710
        %v1712 = vpop.f32.mrb[0].mxu0
        %1713 = vmatprep.mubr.f32.mxu0 0.0
        %1714 = vmatmul.mubr.f32.gmra.mrb[0].mxu0 %v1623
        %v1715 = vpop.f32.mrb[0].mxu0
        %v1716 = vadd.f32 %v1643, %v1715
        %v1717 = vpop.f32.mrb[0].mxu0
        %1718 = vdwg.mxu0
        %v1719 = vadd.f32 %v1469, %v1711
        %v1720 = vadd.f32 %v1470, %v1716
        %1721 = vst.msk [vmem:[#allocation2] sm:$0xff] %vm400, %v1719
        %1722 = vst.msk [vmem:[#allocation2 + $0x8] sm:$0xff] %vm400, %v1720
        // Predicated region
        $region57: #{tpu_custom_call.1} parent=51 // pred_check
          %p1723 = pneg %p231
        $region58: #{tpu_custom_call.1} parent=51 // pred_check_branch
          %1725 = sbr.rel (%p1723) target = $region60
        $region59: #{tpu_custom_call.1} parent=51 // pred_region
          %s1727 = ssub.s32 256, 256
          %1728 = vsyncadd [#allocation3], %s1727
          %s1729 = sshll.u32 [#allocation2], 4
          %s1730 = int_to_ptr.vmem [resolvable:$true] %s1729
          %1735 = dma.vmem_to_hbm [thread:$0]  %s1730, 256, %s8, [#allocation3], 128, 128, 8
        $region60: #{tpu_custom_call.1} parent=51 // pred_fallthru
          _
        // Predicated region
        $region61: #{tpu_custom_call.1} parent=51 // pred_check
          %p1736 = pneg %p231
        $region62: #{tpu_custom_call.1} parent=51 // pred_check_branch
          %1738 = sbr.rel (%p1736) target = $region64
        $region63: #{tpu_custom_call.1} parent=51 // pred_region
          %1739 = dma.done [#allocation3], 256
        $region64: #{tpu_custom_call.1} parent=51 // pred_fallthru
          _
      $region52: #{tpu_custom_call.1} parent=5 // pred_fallthru
        _
      %p1740 = scmp.le.s32.totalorder 2, %s15
      // Predicated region
      $region65: #{tpu_custom_call.1} parent=5 // pred_check
        %p1741 = pneg %p1740
      $region66: #{tpu_custom_call.1} parent=5 // pred_check_branch
        %1743 = sbr.rel (%p1741) target = $region68
      $region67: #{tpu_custom_call.1} parent=5 // pred_region
        %s1744 = ssub.s32 %s15, 2
      $region68: #{tpu_custom_call.1} parent=5 // pred_fallthru
        _
    $region6: #{tpu_custom_call.1} parent=1 // loop_footer
      %s19 = sadd.s32 1, %s15
    $region7: #{tpu_custom_call.1} parent=1 // loop_footer_branch
      %14 = sbr.rel target = $region3
    $region8: #{tpu_custom_call.1} parent=1 // loop_exit
      _
    %1745 = vsyncpa [#allocation3], 1
    %s1746 = scalar_lea.sflag [#allocation3], 1
    %1747 = vsyncpa %s1746, 1

</llo_original>
